<compile_context>
chip_gen: v6e
topology: v6e:2x2x1
jax: 0.10.0
libtpu: 0.0.40
codegen_flags: <defaults>
</compile_context>

<pallas_src>
import math
import functools

import numpy as np
import jax
import jax.numpy as jnp
from jax.experimental import pallas as pl
from jax.experimental.pallas import tpu as pltpu


# ----------------------------------------------------------------------------
# In-kernel helpers: per-row circular shifts for the relative-shift trick.
# Barrel shifter = ceil(log2(W)) static lane rolls (slice+concat) + selects.
# ----------------------------------------------------------------------------
def _roll_last(x, shift):
    """Static circular roll along the last axis (positive = toward higher idx)."""
    w = x.shape[-1]
    s = shift % w
    if s == 0:
        return x
    return jnp.concatenate([x[..., w - s:], x[..., :w - s]], axis=-1)


def _roll_rows(x, sign):
    """Roll row t (axis -2) of x by `sign * t` along the last axis."""
    n_rows = x.shape[-2]
    row = jax.lax.broadcasted_iota(jnp.int32, x.shape, x.ndim - 2)
    for bit in range(max(1, (n_rows - 1).bit_length())):
        amt = 1 << bit
        rolled = _roll_last(x, sign * amt)
        x = jnp.where((row & amt) != 0, rolled, x)
    return x


def _rel_to_abs(rel):
    """(T, 2T-1) relative logits -> (T, T): out[t, s] = rel[t, T-1+s-t]."""
    T = rel.shape[-2]
    return _roll_rows(rel, +1)[..., T - 1:]


def _abs_to_rel(p):
    """(T, T) weights -> (T, 2T-1): out[t, r] = p[t, t+r-(T-1)] (0 when OOB)."""
    T = p.shape[-2]
    zeros = jnp.zeros(p.shape[:-1] + (T - 1,), dtype=p.dtype)
    return _roll_rows(jnp.concatenate([zeros, p], axis=-1), -1)


# ----------------------------------------------------------------------------
# Fused per-batch kernel (channel-major throughout): QKV projection +
# H heads of relative attention + output projection, one grid step per batch.
# ----------------------------------------------------------------------------
def _mha_fused_kernel(len_ref, x_ref, wqkv_ref, bqkv_ref, wo_ref, bo_ref,
                      kembT_ref, vemb_ref, o_ref, qkv_sc, y_sc, *,
                      n_heads, inv_scale, compute_dtype):
    C, T = x_ref.shape
    H = n_heads
    D = C // H
    cdt = compute_dtype                       # MXU input dtype; accum stays f32

    # ---- fused Q/K/V projection: one MXU matmul, channel-major --------------
    x = x_ref[...].astype(cdt)                # cast on VMEM-resident data
    qkv = jnp.dot(wqkv_ref[...], x, preferred_element_type=jnp.float32)  # (3C,T)
    qkv_sc[...] = qkv + bqkv_ref[...]                                    # +(3C,1)

    # ---- mask from the sequence length, hoisted above the head loop ---------
    L = len_ref[pl.program_id(0)]
    row = jax.lax.broadcasted_iota(jnp.int32, (T, T), 0)
    col = jax.lax.broadcasted_iota(jnp.int32, (T, T), 1)
    valid = jnp.logical_and(row < L, col < L)              # (T, T) bool

    kembT = kembT_ref[...]                                 # (D, 2T-1) pre-transposed
    vemb = vemb_ref[...]                                   # (2T-1, D)

    # One head at a time (bounds live f32 intermediates to a single head).
    def head_body(h, carry):
        off = h * D
        # 1/scale folded into q once, covering both logit terms.
        q = (qkv_sc[pl.ds(off, D), :] * inv_scale).astype(cdt)          # (D, T)
        k = qkv_sc[pl.ds(C + off, D), :].astype(cdt)                    # (D, T)
        v = qkv_sc[pl.ds(2 * C + off, D), :].astype(cdt)                # (D, T)

        # content-content logits: score[t,s] = sum_d q[d,t] k[d,s]   (MXU)
        score = jax.lax.dot_general(q, k, (((0,), (0,)), ((), ())),
                                    preferred_element_type=jnp.float32)  # (T,T)
        # content-position logits via the relative-shift trick        (MXU)
        rel = jax.lax.dot_general(q, kembT, (((0,), (0,)), ((), ())),
                                  preferred_element_type=jnp.float32)    # (T,2T-1)
        score = score + _rel_to_abs(rel)

        # masked_fill(mask == 0, -1e4) — same semantics as the torch module.
        score = jnp.where(valid, score, jnp.float32(-10000.0))

        # numerically-stable softmax in f32; divide -> EUP reciprocal multiply.
        score = score - jnp.max(score, axis=-1, keepdims=True)
        e = jnp.exp(score)
        denom = jnp.sum(e, axis=-1, keepdims=True)
        r = pl.reciprocal(denom, approx=True)
        r = r * (2.0 - denom * r)            # one Newton step -> ~f32 accuracy
        p = (e * r).astype(cdt)              # (T, T)

        # attn @ V and the relative-position value term, channel-major (MXU).
        out = jax.lax.dot_general(v, p, (((1,), (1,)), ((), ())),
                                  preferred_element_type=jnp.float32)    # (D, T)
        out = out + jax.lax.dot_general(vemb, _abs_to_rel(p),
                                        (((0,), (1,)), ((), ())),
                                        preferred_element_type=jnp.float32)
        y_sc[pl.ds(off, D), :] = out          # head h lands at channels [hD, hD+D)
        return carry

    jax.lax.fori_loop(0, H, head_body, 0)

    # ---- output projection, still channel-major (no y.T) --------------------
    y = y_sc[...].astype(cdt)                                            # (C, T)
    o = jnp.dot(wo_ref[...], y, preferred_element_type=jnp.float32)     # (C, T)
    o_ref[...] = (o + bo_ref[...]).astype(o_ref.dtype)


# ----------------------------------------------------------------------------
# Wrapper: parameter prep (stack QKV weights, slice + transpose the learned
# relative embeddings exactly like the PyTorch pad/slice) and the pallas_call.
# ----------------------------------------------------------------------------
def _slice_rel_emb(emb_rel, T, window_size):
    # emb_rel: (1, 2*window+1, D)  ->  (2T-1, D)
    pad_length = max(0, T - (window_size + 1))
    start = max(0, window_size + 1 - T)
    padded = jnp.pad(emb_rel, ((0, 0), (pad_length, pad_length), (0, 0)))
    return padded[0, start:start + 2 * T - 1]


def _pick_vmem_limit_bytes():
    """~48 MiB on v7x (64 MiB physical), up to 96 MiB on v5e/v6e (128 MiB)."""
    try:
        if jax.devices()[0].platform != "tpu":
            return None                      # CPU / interpret: leave the default
        cap = pltpu.get_tpu_info().vmem_capacity_bytes
        return min((int(cap) * 3) // 4, 96 * 1024 * 1024)
    except Exception:
        return None


def mha_forward(x, lengths, params, n_heads, window_size,
                compute_dtype=jnp.bfloat16):
    """x: (B, C, T) channel-major; lengths: (B,) int32 valid sequence lengths.

    The attention mask is rebuilt in-kernel as valid[t] & valid[s] (this is
    exactly how the prior encoder builds `attn_mask` from `x_mask`).
    """
    Wq, bq, Wk, bk, Wv, bv, Wo, bo, emb_rel_k, emb_rel_v = params
    B, C, T = x.shape
    H = n_heads
    D = C // H
    W = 2 * T - 1
    inv_scale = 1.0 / math.sqrt(D)

    # Parameter prep (tiny, once per call, outside the hot kernel).
    wqkv = jnp.concatenate([Wq, Wk, Wv], axis=0).astype(compute_dtype)       # (3C, C)
    bqkv = jnp.concatenate([bq, bk, bv], axis=0).reshape(3 * C, 1).astype(jnp.float32)
    wo = Wo.astype(compute_dtype)                                            # (C, C)
    bo2 = bo.reshape(C, 1).astype(jnp.float32)
    kembT = _slice_rel_emb(emb_rel_k, T, window_size).T.astype(compute_dtype)  # (D, W)
    vemb = _slice_rel_emb(emb_rel_v, T, window_size).astype(compute_dtype)     # (W, D)
    lengths = lengths.astype(jnp.int32)

    kernel = functools.partial(_mha_fused_kernel, n_heads=H,
                               inv_scale=inv_scale, compute_dtype=compute_dtype)

    grid_spec = pltpu.PrefetchScalarGridSpec(
        num_scalar_prefetch=1,                       # lengths -> SMEM
        grid=(B,),
        in_specs=[
            pl.BlockSpec((None, C, T), lambda b, lens: (b, 0, 0)),   # x (per batch)
            pl.BlockSpec((3 * C, C), lambda b, lens: (0, 0)),        # Wq|Wk|Wv
            pl.BlockSpec((3 * C, 1), lambda b, lens: (0, 0)),        # stacked biases
            pl.BlockSpec((C, C), lambda b, lens: (0, 0)),            # Wo
            pl.BlockSpec((C, 1), lambda b, lens: (0, 0)),            # bo
            pl.BlockSpec((D, W), lambda b, lens: (0, 0)),            # emb_rel_k^T window
            pl.BlockSpec((W, D), lambda b, lens: (0, 0)),            # emb_rel_v window
        ],
        out_specs=pl.BlockSpec((None, C, T), lambda b, lens: (b, 0, 0)),
        scratch_shapes=[
            pltpu.VMEM((3 * C, T), jnp.float32),    # projected q/k/v slab
            pltpu.VMEM((C, T), jnp.float32),        # per-head outputs (channel-major)
        ],
    )

    return pl.pallas_call(
        kernel,
        out_shape=jax.ShapeDtypeStruct((B, C, T), jnp.float32),
        grid_spec=grid_spec,
        compiler_params=pltpu.CompilerParams(
            dimension_semantics=("parallel",),          # megacore / v7x 2-TC sharding
            vmem_limit_bytes=_pick_vmem_limit_bytes(),  # generation-aware budget
        ),
    )(lengths, x, wqkv, bqkv, wo, bo2, kembT, vemb)


# ----------------------------------------------------------------------------
# Pure-JAX reference (same math as the PyTorch module, explicit (T, T, D)
# gather, no Pallas, no rel-shift trick) for an independent cross-check.
# ----------------------------------------------------------------------------
def _get_rel_emb_abs(emb_rel, T, window_size):
    pad_length = max(0, T - (window_size + 1))
    start = max(0, window_size + 1 - T)
    padded = jnp.pad(emb_rel, ((0, 0), (pad_length, pad_length), (0, 0)))
    emb = padded[0, start:start + 2 * T - 1]                    # (2T-1, D)
    idx = (T - 1) + jnp.arange(T)[None, :] - jnp.arange(T)[:, None]
    return emb[idx]                                             # (T, T, D)


def mha_reference(x, mask, params, n_heads, window_size):
    Wq, bq, Wk, bk, Wv, bv, Wo, bo, emb_rel_k, emb_rel_v = params
    B, C, T = x.shape
    H = n_heads
    D = C // H
    scale = math.sqrt(D)

    def proj(x, w, b):
        return jnp.einsum("oc,bct->bot", w, x) + b[None, :, None]

    q = proj(x, Wq, bq).reshape(B, H, D, T).transpose(0, 1, 3, 2)
    k = proj(x, Wk, bk).reshape(B, H, D, T).transpose(0, 1, 3, 2)
    v = proj(x, Wv, bv).reshape(B, H, D, T).transpose(0, 1, 3, 2)

    kemb_abs = _get_rel_emb_abs(emb_rel_k, T, window_size)
    vemb_abs = _get_rel_emb_abs(emb_rel_v, T, window_size)

    score = jnp.einsum("bhtd,bhsd->bhts", q, k) / scale
    score = score + jnp.einsum("bhtd,tsd->bhts", q, kemb_abs) / scale
    score = jnp.where(mask == 0, -10000.0, score)
    p = jax.nn.softmax(score, axis=-1)
    out = jnp.einsum("bhts,bhsd->bhtd", p, v)
    out = out + jnp.einsum("bhts,tsd->bhtd", p, vemb_abs)
    y = out.transpose(0, 1, 3, 2).reshape(B, C, T)
    return proj(y, Wo, bo)


# ----------------------------------------------------------------------------
# Deterministic synthetic parameters (shapes from the module __init__).
# ----------------------------------------------------------------------------
def make_params(key, channels, n_heads, window_size):
    D = channels // n_heads
    ks = jax.random.split(key, 10)

    def xavier(k, shape):
        fan_out, fan_in = shape
        bound = math.sqrt(6.0 / (fan_in + fan_out))
        return jax.random.uniform(k, shape, jnp.float32, -bound, bound)

    bbound = 1.0 / math.sqrt(channels)

    Wq = xavier(ks[0], (channels, channels))
    Wk = xavier(ks[1], (channels, channels))
    Wv = xavier(ks[2], (channels, channels))
    Wo = xavier(ks[3], (channels, channels))
    bq = jax.random.uniform(ks[4], (channels,), jnp.float32, -bbound, bbound)
    bk = jax.random.uniform(ks[5], (channels,), jnp.float32, -bbound, bbound)
    bv = jax.random.uniform(ks[6], (channels,), jnp.float32, -bbound, bbound)
    bo = jax.random.uniform(ks[7], (channels,), jnp.float32, -bbound, bbound)
    rel_stddev = D ** (-0.5)
    emb_rel_k = jax.random.normal(ks[8], (1, 2 * window_size + 1, D), jnp.float32) * rel_stddev
    emb_rel_v = jax.random.normal(ks[9], (1, 2 * window_size + 1, D), jnp.float32) * rel_stddev
    return (Wq, bq, Wk, bk, Wv, bv, Wo, bo, emb_rel_k, emb_rel_v)


if __name__ == "__main__":
    B, C, T = 2, 32, 16
    n_heads, window_size = 4, 4

    key = jax.random.PRNGKey(0)
    k_x, k_p = jax.random.split(key)

    x = jax.random.normal(k_x, (B, C, T), jnp.float32)

    # sequence-length mask (second batch element padded to length 12)
    lengths = jnp.array([T, 12], dtype=jnp.int32)
    seq_mask = (jnp.arange(T)[None, :] < lengths[:, None]).astype(jnp.float32)  # (B, T)
    mask = seq_mask[:, None, :, None] * seq_mask[:, None, None, :]              # (B, 1, T, T)

    params = make_params(k_p, C, n_heads, window_size)

    y_ref = mha_reference(x, mask, params, n_heads, window_size)

    # f32 path: strict check against the pure-JAX reference.
    # (bf16 is the production default of mha_forward but is not exercised here:
    #  the sandbox CPU interpreter cannot execute BF16xBF16=F32 dots.)
    y = jax.block_until_ready(
        mha_forward(x, lengths, params, n_heads, window_size,
                    compute_dtype=jnp.float32))
    np.testing.assert_allclose(np.asarray(y), np.asarray(y_ref),
                               rtol=1e-3, atol=1e-3)

    print("KERNEL_OK")
</pallas_src>

<mosaic_0001>
module attributes {stable_mosaic.version = 11 : i64} {
  func.func @_mha_fused_kernel(%arg0: i32, %arg1: memref<2xi32, #tpu.memory_space<smem>>, %arg2: memref<1x32x16xf32, #tpu.memory_space<vmem>>, %arg3: memref<96x32xf32, #tpu.memory_space<vmem>>, %arg4: memref<96x1xf32, #tpu.memory_space<vmem>>, %arg5: memref<32x32xf32, #tpu.memory_space<vmem>>, %arg6: memref<32x1xf32, #tpu.memory_space<vmem>>, %arg7: memref<8x31xf32, #tpu.memory_space<vmem>>, %arg8: memref<31x8xf32, #tpu.memory_space<vmem>>, %arg9: memref<1x32x16xf32, #tpu.memory_space<vmem>>, %arg10: memref<96x16xf32, #tpu.memory_space<vmem>>, %arg11: memref<32x16xf32, #tpu.memory_space<vmem>>) attributes {dimension_semantics = [#tpu.dimension_semantics<parallel>], iteration_bounds = array<i64: 2>, scalar_prefetch = 1 : i64, scratch_operands = 2 : i64, tpu.core_type = #tpu.core_type<tc>, window_params = [{transform_indices = @transform_0, window_bounds = array<i64: 1, 32, 16>}, {pipeline_mode = #tpu.pipeline_mode<synchronous>, transform_indices = @transform_1, window_bounds = array<i64: 96, 32>}, {pipeline_mode = #tpu.pipeline_mode<synchronous>, transform_indices = @transform_2, window_bounds = array<i64: 96, 1>}, {pipeline_mode = #tpu.pipeline_mode<synchronous>, transform_indices = @transform_3, window_bounds = array<i64: 32, 32>}, {pipeline_mode = #tpu.pipeline_mode<synchronous>, transform_indices = @transform_4, window_bounds = array<i64: 32, 1>}, {pipeline_mode = #tpu.pipeline_mode<synchronous>, transform_indices = @transform_5, window_bounds = array<i64: 8, 31>}, {pipeline_mode = #tpu.pipeline_mode<synchronous>, transform_indices = @transform_6, window_bounds = array<i64: 31, 8>}, {transform_indices = @transform_7, window_bounds = array<i64: 1, 32, 16>}]} {
    %c0 = arith.constant 0 : index
    %c0_0 = arith.constant 0 : index
    %c0_1 = arith.constant 0 : index
    %0 = vector.load %arg2[%c0, %c0_0, %c0_1] : memref<1x32x16xf32, #tpu.memory_space<vmem>>, vector<1x32x16xf32>
    %1 = vector.shape_cast %0 : vector<1x32x16xf32> to vector<32x16xf32>
    %c0_2 = arith.constant 0 : index
    %c0_3 = arith.constant 0 : index
    %2 = vector.load %arg3[%c0_2, %c0_3] : memref<96x32xf32, #tpu.memory_space<vmem>>, vector<96x32xf32>
    %cst = arith.constant dense<0.000000e+00> : vector<96x16xf32>
    %3 = tpu.matmul %2, %1, %cst {dimension_numbers = #tpu.dot_dimension_numbers<[1], [0], [0], [1], [0, 0, 1, 1], [], []>} : vector<96x32xf32>, vector<32x16xf32>, vector<96x16xf32> -> vector<96x16xf32>
    %c0_4 = arith.constant 0 : index
    %c0_5 = arith.constant 0 : index
    %4 = vector.load %arg4[%c0_4, %c0_5] : memref<96x1xf32, #tpu.memory_space<vmem>>, vector<96x1xf32>
    %5 = vector.broadcast %4 : vector<96x1xf32> to vector<96x16xf32>
    %6 = arith.addf %3, %5 : vector<96x16xf32>
    %c0_6 = arith.constant 0 : index
    %c0_7 = arith.constant 0 : index
    %7 = vector.load %arg10[%c0_6, %c0_7] : memref<96x16xf32, #tpu.memory_space<vmem>>, vector<96x16xf32>
    tpu.vector_store %arg10[%c0_6, %c0_7], %6 {strides = array<i32>} : memref<96x16xf32, #tpu.memory_space<vmem>>, vector<96x16xf32>,
    %8 = arith.index_cast %arg0 : i32 to index
    %9 = memref.load %arg1[%8] : memref<2xi32, #tpu.memory_space<smem>>
    %10 = tpu.iota {dimensions = array<i32: 0>} : vector<16x16xi32>
    %11 = tpu.iota {dimensions = array<i32: 1>} : vector<16x16xi32>
    %12 = vector.broadcast %9 : i32 to vector<16x16xi32>
    %13 = arith.cmpi slt, %10, %12 : vector<16x16xi32>
    %14 = vector.broadcast %9 : i32 to vector<16x16xi32>
    %15 = arith.cmpi slt, %11, %14 : vector<16x16xi32>
    %16 = arith.andi %13, %15 : vector<16x16xi1>
    %c0_8 = arith.constant 0 : index
    %c0_9 = arith.constant 0 : index
    %17 = vector.load %arg7[%c0_8, %c0_9] : memref<8x31xf32, #tpu.memory_space<vmem>>, vector<8x31xf32>
    %c0_10 = arith.constant 0 : index
    %c0_11 = arith.constant 0 : index
    %18 = vector.load %arg8[%c0_10, %c0_11] : memref<31x8xf32, #tpu.memory_space<vmem>>, vector<31x8xf32>
    %c0_i32 = arith.constant 0 : i32
    %c4_i32 = arith.constant 4 : i32
    %19 = arith.addi %c0_i32, %c4_i32 : i32
    %c1_i32 = arith.constant 1 : i32
    scf.for %arg12 = %c0_i32 to %19 step %c1_i32  : i32 {
      %c8_i32 = arith.constant 8 : i32
      %29 = arith.muli %arg12, %c8_i32 : i32
      %30 = arith.index_cast %29 : i32 to index
      %c0_23 = arith.constant 0 : index
      %31 = vector.load %arg10[%30, %c0_23] : memref<96x16xf32, #tpu.memory_space<vmem>>, vector<8x16xf32>
      %cst_24 = arith.constant 0.353553385 : f32
      %32 = vector.broadcast %cst_24 : f32 to vector<8x16xf32>
      %33 = arith.mulf %31, %32 : vector<8x16xf32>
      %c32_i32 = arith.constant 32 : i32
      %34 = arith.addi %c32_i32, %29 : i32
      %35 = arith.index_cast %34 : i32 to index
      %c0_25 = arith.constant 0 : index
      %36 = vector.load %arg10[%35, %c0_25] : memref<96x16xf32, #tpu.memory_space<vmem>>, vector<8x16xf32>
      %c64_i32 = arith.constant 64 : i32
      %37 = arith.addi %c64_i32, %29 : i32
      %38 = arith.index_cast %37 : i32 to index
      %c0_26 = arith.constant 0 : index
      %39 = vector.load %arg10[%38, %c0_26] : memref<96x16xf32, #tpu.memory_space<vmem>>, vector<8x16xf32>
      %cst_27 = arith.constant dense<0.000000e+00> : vector<16x16xf32>
      %40 = tpu.matmul %33, %36, %cst_27 {dimension_numbers = #tpu.dot_dimension_numbers<[0], [0], [1], [1], [0, 1, 1, 1], [], []>} : vector<8x16xf32>, vector<8x16xf32>, vector<16x16xf32> -> vector<16x16xf32>
      %cst_28 = arith.constant dense<0.000000e+00> : vector<16x31xf32>
      %41 = tpu.matmul %33, %17, %cst_28 {dimension_numbers = #tpu.dot_dimension_numbers<[0], [0], [1], [1], [0, 1, 1, 1], [], []>} : vector<8x16xf32>, vector<8x31xf32>, vector<16x31xf32> -> vector<16x31xf32>
      %42 = tpu.iota {dimensions = array<i32: 0>} : vector<16x31xi32>
      %43 = vector.extract_strided_slice %41 {offsets = [0, 30], sizes = [16, 1], strides = [1, 1]} : vector<16x31xf32> to vector<16x1xf32>
      %44 = vector.extract_strided_slice %41 {offsets = [0, 0], sizes = [16, 30], strides = [1, 1]} : vector<16x31xf32> to vector<16x30xf32>
      %45 = tpu.concatenate %43, %44 in 1 : vector<16x1xf32>, vector<16x30xf32> -> vector<16x31xf32>
      %c1_i32_29 = arith.constant 1 : i32
      %46 = vector.broadcast %c1_i32_29 : i32 to vector<16x31xi32>
      %47 = arith.andi %42, %46 : vector<16x31xi32>
      %c0_i32_30 = arith.constant 0 : i32
      %48 = vector.broadcast %c0_i32_30 : i32 to vector<16x31xi32>
      %49 = arith.cmpi ne, %47, %48 : vector<16x31xi32>
      %50 = arith.select %49, %45, %41 : vector<16x31xi1>, vector<16x31xf32>
      %51 = vector.extract_strided_slice %50 {offsets = [0, 29], sizes = [16, 2], strides = [1, 1]} : vector<16x31xf32> to vector<16x2xf32>
      %52 = vector.extract_strided_slice %50 {offsets = [0, 0], sizes = [16, 29], strides = [1, 1]} : vector<16x31xf32> to vector<16x29xf32>
      %53 = tpu.concatenate %51, %52 in 1 : vector<16x2xf32>, vector<16x29xf32> -> vector<16x31xf32>
      %c2_i32 = arith.constant 2 : i32
      %54 = vector.broadcast %c2_i32 : i32 to vector<16x31xi32>
      %55 = arith.andi %42, %54 : vector<16x31xi32>
      %c0_i32_31 = arith.constant 0 : i32
      %56 = vector.broadcast %c0_i32_31 : i32 to vector<16x31xi32>
      %57 = arith.cmpi ne, %55, %56 : vector<16x31xi32>
      %58 = arith.select %57, %53, %50 : vector<16x31xi1>, vector<16x31xf32>
      %59 = vector.extract_strided_slice %58 {offsets = [0, 27], sizes = [16, 4], strides = [1, 1]} : vector<16x31xf32> to vector<16x4xf32>
      %60 = vector.extract_strided_slice %58 {offsets = [0, 0], sizes = [16, 27], strides = [1, 1]} : vector<16x31xf32> to vector<16x27xf32>
      %61 = tpu.concatenate %59, %60 in 1 : vector<16x4xf32>, vector<16x27xf32> -> vector<16x31xf32>
      %c4_i32_32 = arith.constant 4 : i32
      %62 = vector.broadcast %c4_i32_32 : i32 to vector<16x31xi32>
      %63 = arith.andi %42, %62 : vector<16x31xi32>
      %c0_i32_33 = arith.constant 0 : i32
      %64 = vector.broadcast %c0_i32_33 : i32 to vector<16x31xi32>
      %65 = arith.cmpi ne, %63, %64 : vector<16x31xi32>
      %66 = arith.select %65, %61, %58 : vector<16x31xi1>, vector<16x31xf32>
      %67 = vector.extract_strided_slice %66 {offsets = [0, 23], sizes = [16, 8], strides = [1, 1]} : vector<16x31xf32> to vector<16x8xf32>
      %68 = vector.extract_strided_slice %66 {offsets = [0, 0], sizes = [16, 23], strides = [1, 1]} : vector<16x31xf32> to vector<16x23xf32>
      %69 = tpu.concatenate %67, %68 in 1 : vector<16x8xf32>, vector<16x23xf32> -> vector<16x31xf32>
      %c8_i32_34 = arith.constant 8 : i32
      %70 = vector.broadcast %c8_i32_34 : i32 to vector<16x31xi32>
      %71 = arith.andi %42, %70 : vector<16x31xi32>
      %c0_i32_35 = arith.constant 0 : i32
      %72 = vector.broadcast %c0_i32_35 : i32 to vector<16x31xi32>
      %73 = arith.cmpi ne, %71, %72 : vector<16x31xi32>
      %74 = arith.select %73, %69, %66 : vector<16x31xi1>, vector<16x31xf32>
      %75 = vector.extract_strided_slice %74 {offsets = [0, 15], sizes = [16, 16], strides = [1, 1]} : vector<16x31xf32> to vector<16x16xf32>
      %76 = arith.addf %40, %75 : vector<16x16xf32>
      %cst_36 = arith.constant -1.000000e+04 : f32
      %77 = vector.broadcast %cst_36 : f32 to vector<16x16xf32>
      %78 = arith.select %16, %76, %77 : vector<16x16xi1>, vector<16x16xf32>
      %cst_37 = arith.constant dense<0xFF800000> : vector<16xf32>
      %79 = vector.multi_reduction <maximumf>, %78, %cst_37 [1] : vector<16x16xf32> to vector<16xf32>
      %80 = vector.shape_cast %79 : vector<16xf32> to vector<16x1xf32>
      %81 = vector.broadcast %80 : vector<16x1xf32> to vector<16x16xf32>
      %82 = arith.subf %78, %81 : vector<16x16xf32>
      %83 = math.exp %82 : vector<16x16xf32>
      %cst_38 = arith.constant dense<0.000000e+00> : vector<16xf32>
      %84 = vector.multi_reduction <add>, %83, %cst_38 [1] : vector<16x16xf32> to vector<16xf32>
      %85 = vector.shape_cast %84 : vector<16xf32> to vector<16x1xf32>
      %86 = tpu.reciprocal %85 {approx = true} : vector<16x1xf32> -> vector<16x1xf32>
      %87 = arith.mulf %85, %86 : vector<16x1xf32>
      %cst_39 = arith.constant 2.000000e+00 : f32
      %88 = vector.broadcast %cst_39 : f32 to vector<16x1xf32>
      %89 = arith.subf %88, %87 : vector<16x1xf32>
      %90 = arith.mulf %86, %89 : vector<16x1xf32>
      %91 = vector.broadcast %90 : vector<16x1xf32> to vector<16x16xf32>
      %92 = arith.mulf %83, %91 : vector<16x16xf32>
      %cst_40 = arith.constant dense<0.000000e+00> : vector<8x16xf32>
      %93 = tpu.matmul %39, %92, %cst_40 {dimension_numbers = #tpu.dot_dimension_numbers<[1], [1], [0], [0], [0, 0, 1, 0], [], []>} : vector<8x16xf32>, vector<16x16xf32>, vector<8x16xf32> -> vector<8x16xf32>
      %cst_41 = arith.constant 0.000000e+00 : f32
      %94 = vector.broadcast %cst_41 : f32 to vector<16x15xf32>
      %95 = tpu.concatenate %94, %92 in 1 : vector<16x15xf32>, vector<16x16xf32> -> vector<16x31xf32>
      %96 = tpu.iota {dimensions = array<i32: 0>} : vector<16x31xi32>
      %97 = vector.extract_strided_slice %95 {offsets = [0, 1], sizes = [16, 30], strides = [1, 1]} : vector<16x31xf32> to vector<16x30xf32>
      %98 = vector.extract_strided_slice %95 {offsets = [0, 0], sizes = [16, 1], strides = [1, 1]} : vector<16x31xf32> to vector<16x1xf32>
      %99 = tpu.concatenate %97, %98 in 1 : vector<16x30xf32>, vector<16x1xf32> -> vector<16x31xf32>
      %c1_i32_42 = arith.constant 1 : i32
      %100 = vector.broadcast %c1_i32_42 : i32 to vector<16x31xi32>
      %101 = arith.andi %96, %100 : vector<16x31xi32>
      %c0_i32_43 = arith.constant 0 : i32
      %102 = vector.broadcast %c0_i32_43 : i32 to vector<16x31xi32>
      %103 = arith.cmpi ne, %101, %102 : vector<16x31xi32>
      %104 = arith.select %103, %99, %95 : vector<16x31xi1>, vector<16x31xf32>
      %105 = vector.extract_strided_slice %104 {offsets = [0, 2], sizes = [16, 29], strides = [1, 1]} : vector<16x31xf32> to vector<16x29xf32>
      %106 = vector.extract_strided_slice %104 {offsets = [0, 0], sizes = [16, 2], strides = [1, 1]} : vector<16x31xf32> to vector<16x2xf32>
      %107 = tpu.concatenate %105, %106 in 1 : vector<16x29xf32>, vector<16x2xf32> -> vector<16x31xf32>
      %c2_i32_44 = arith.constant 2 : i32
      %108 = vector.broadcast %c2_i32_44 : i32 to vector<16x31xi32>
      %109 = arith.andi %96, %108 : vector<16x31xi32>
      %c0_i32_45 = arith.constant 0 : i32
      %110 = vector.broadcast %c0_i32_45 : i32 to vector<16x31xi32>
      %111 = arith.cmpi ne, %109, %110 : vector<16x31xi32>
      %112 = arith.select %111, %107, %104 : vector<16x31xi1>, vector<16x31xf32>
      %113 = vector.extract_strided_slice %112 {offsets = [0, 4], sizes = [16, 27], strides = [1, 1]} : vector<16x31xf32> to vector<16x27xf32>
      %114 = vector.extract_strided_slice %112 {offsets = [0, 0], sizes = [16, 4], strides = [1, 1]} : vector<16x31xf32> to vector<16x4xf32>
      %115 = tpu.concatenate %113, %114 in 1 : vector<16x27xf32>, vector<16x4xf32> -> vector<16x31xf32>
      %c4_i32_46 = arith.constant 4 : i32
      %116 = vector.broadcast %c4_i32_46 : i32 to vector<16x31xi32>
      %117 = arith.andi %96, %116 : vector<16x31xi32>
      %c0_i32_47 = arith.constant 0 : i32
      %118 = vector.broadcast %c0_i32_47 : i32 to vector<16x31xi32>
      %119 = arith.cmpi ne, %117, %118 : vector<16x31xi32>
      %120 = arith.select %119, %115, %112 : vector<16x31xi1>, vector<16x31xf32>
      %121 = vector.extract_strided_slice %120 {offsets = [0, 8], sizes = [16, 23], strides = [1, 1]} : vector<16x31xf32> to vector<16x23xf32>
      %122 = vector.extract_strided_slice %120 {offsets = [0, 0], sizes = [16, 8], strides = [1, 1]} : vector<16x31xf32> to vector<16x8xf32>
      %123 = tpu.concatenate %121, %122 in 1 : vector<16x23xf32>, vector<16x8xf32> -> vector<16x31xf32>
      %c8_i32_48 = arith.constant 8 : i32
      %124 = vector.broadcast %c8_i32_48 : i32 to vector<16x31xi32>
      %125 = arith.andi %96, %124 : vector<16x31xi32>
      %c0_i32_49 = arith.constant 0 : i32
      %126 = vector.broadcast %c0_i32_49 : i32 to vector<16x31xi32>
      %127 = arith.cmpi ne, %125, %126 : vector<16x31xi32>
      %128 = arith.select %127, %123, %120 : vector<16x31xi1>, vector<16x31xf32>
      %cst_50 = arith.constant dense<0.000000e+00> : vector<8x16xf32>
      %129 = tpu.matmul %18, %128, %cst_50 {dimension_numbers = #tpu.dot_dimension_numbers<[0], [1], [1], [0], [0, 1, 1, 0], [], []>} : vector<31x8xf32>, vector<16x31xf32>, vector<8x16xf32> -> vector<8x16xf32>
      %130 = arith.addf %93, %129 : vector<8x16xf32>
      %131 = arith.index_cast %29 : i32 to index
      %c0_51 = arith.constant 0 : index
      %132 = vector.load %arg11[%131, %c0_51] : memref<32x16xf32, #tpu.memory_space<vmem>>, vector<8x16xf32>
      tpu.vector_store %arg11[%131, %c0_51], %130 {strides = array<i32>} : memref<32x16xf32, #tpu.memory_space<vmem>>, vector<8x16xf32>,
    }
    %c4_i32_12 = arith.constant 4 : i32
    %c0_13 = arith.constant 0 : index
    %c0_14 = arith.constant 0 : index
    %20 = vector.load %arg11[%c0_13, %c0_14] : memref<32x16xf32, #tpu.memory_space<vmem>>, vector<32x16xf32>
    %c0_15 = arith.constant 0 : index
    %c0_16 = arith.constant 0 : index
    %21 = vector.load %arg5[%c0_15, %c0_16] : memref<32x32xf32, #tpu.memory_space<vmem>>, vector<32x32xf32>
    %cst_17 = arith.constant dense<0.000000e+00> : vector<32x16xf32>
    %22 = tpu.matmul %21, %20, %cst_17 {dimension_numbers = #tpu.dot_dimension_numbers<[1], [0], [0], [1], [0, 0, 1, 1], [], []>} : vector<32x32xf32>, vector<32x16xf32>, vector<32x16xf32> -> vector<32x16xf32>
    %c0_18 = arith.constant 0 : index
    %c0_19 = arith.constant 0 : index
    %23 = vector.load %arg6[%c0_18, %c0_19] : memref<32x1xf32, #tpu.memory_space<vmem>>, vector<32x1xf32>
    %24 = vector.broadcast %23 : vector<32x1xf32> to vector<32x16xf32>
    %25 = arith.addf %22, %24 : vector<32x16xf32>
    %c0_20 = arith.constant 0 : index
    %c0_21 = arith.constant 0 : index
    %c0_22 = arith.constant 0 : index
    %26 = vector.load %arg9[%c0_20, %c0_21, %c0_22] : memref<1x32x16xf32, #tpu.memory_space<vmem>>, vector<1x32x16xf32>
    %27 = vector.shape_cast %26 : vector<1x32x16xf32> to vector<32x16xf32>
    %28 = vector.shape_cast %25 : vector<32x16xf32> to vector<1x32x16xf32>
    tpu.vector_store %arg9[%c0_20, %c0_21, %c0_22], %28 {strides = array<i32>} : memref<1x32x16xf32, #tpu.memory_space<vmem>>, vector<1x32x16xf32>,
    return
  }
  func.func @transform_0(%arg0: i32, %arg1: memref<2xi32, #tpu.memory_space<smem>>) -> (i32, i32, i32) {
    %c0_i32 = arith.constant 0 : i32
    %c0_i32_0 = arith.constant 0 : i32
    %c0_i32_1 = arith.constant 0 : i32
    return %arg0, %c0_i32, %c0_i32_0 : i32, i32, i32
  }
  func.func @transform_1(%arg0: i32, %arg1: memref<2xi32, #tpu.memory_space<smem>>) -> (i32, i32) {
    %c0_i32 = arith.constant 0 : i32
    %c0_i32_0 = arith.constant 0 : i32
    %c0_i32_1 = arith.constant 0 : i32
    return %c0_i32, %c0_i32_0 : i32, i32
  }
  func.func @transform_2(%arg0: i32, %arg1: memref<2xi32, #tpu.memory_space<smem>>) -> (i32, i32) {
    %c0_i32 = arith.constant 0 : i32
    %c0_i32_0 = arith.constant 0 : i32
    %c0_i32_1 = arith.constant 0 : i32
    return %c0_i32, %c0_i32_0 : i32, i32
  }
  func.func @transform_3(%arg0: i32, %arg1: memref<2xi32, #tpu.memory_space<smem>>) -> (i32, i32) {
    %c0_i32 = arith.constant 0 : i32
    %c0_i32_0 = arith.constant 0 : i32
    %c0_i32_1 = arith.constant 0 : i32
    return %c0_i32, %c0_i32_0 : i32, i32
  }
  func.func @transform_4(%arg0: i32, %arg1: memref<2xi32, #tpu.memory_space<smem>>) -> (i32, i32) {
    %c0_i32 = arith.constant 0 : i32
    %c0_i32_0 = arith.constant 0 : i32
    %c0_i32_1 = arith.constant 0 : i32
    return %c0_i32, %c0_i32_0 : i32, i32
  }
  func.func @transform_5(%arg0: i32, %arg1: memref<2xi32, #tpu.memory_space<smem>>) -> (i32, i32) {
    %c0_i32 = arith.constant 0 : i32
    %c0_i32_0 = arith.constant 0 : i32
    %c0_i32_1 = arith.constant 0 : i32
    return %c0_i32, %c0_i32_0 : i32, i32
  }
  func.func @transform_6(%arg0: i32, %arg1: memref<2xi32, #tpu.memory_space<smem>>) -> (i32, i32) {
    %c0_i32 = arith.constant 0 : i32
    %c0_i32_0 = arith.constant 0 : i32
    %c0_i32_1 = arith.constant 0 : i32
    return %c0_i32, %c0_i32_0 : i32, i32
  }
  func.func @transform_7(%arg0: i32, %arg1: memref<2xi32, #tpu.memory_space<smem>>) -> (i32, i32, i32) {
    %c0_i32 = arith.constant 0 : i32
    %c0_i32_0 = arith.constant 0 : i32
    %c0_i32_1 = arith.constant 0 : i32
    return %arg0, %c0_i32, %c0_i32_0 : i32, i32, i32
  }
}

</mosaic_0001>

<llo_original>
// kernel: tpu_custom_call.1
$region0: #{tpu_custom_call.1}
  #allocation0 [shape = 'u32[]', space=smem, size = 0x4, offset = 0x4, fixed_abs, tag = 'smem constant byte address 0x4 - core index']
  #allocation1 [shape = 'u32[144,128]{1,0:T(1,128)}', space=vmem, size = 0x12000, scoped, tag = 'internal scratch']
  #allocation2 [shape = 'f32[96,16]{1,0:T(8,128)}', space=vmem, size = 0xc000, scoped, tag = 'scratch operand']
  #allocation3 [shape = 'f32[32,16]{1,0:T(8,128)}', space=vmem, size = 0x4000, scoped, tag = 'scratch operand']
  #allocation4 [shape = 's32[1]{0}', space=sflag, size = 0x4, scoped, tag = 'scoped memory for tpu_custom_call.1']
  #allocation5 [shape = 'u8[512]{0}', space=smem, size = 0x200, scoped, tag = 'prefetched SMEM operand 0']
  %s0 = inlined_call_operand.vmem [shape: s32[2], index: 0, kind: input, shape index: {}]
  %s1 = inlined_call_operand.vmem [shape: f32[2,32,16], index: 1, kind: input, shape index: {}]
  %s2 = inlined_call_operand.vmem [shape: f32[96,32], index: 2, kind: input, shape index: {}]
  %s3 = inlined_call_operand.vmem [shape: f32[96,1], index: 3, kind: input, shape index: {}]
  %s4 = inlined_call_operand.vmem [shape: f32[32,32], index: 4, kind: input, shape index: {}]
  %s5 = inlined_call_operand.vmem [shape: f32[32,1], index: 5, kind: input, shape index: {}]
  %s6 = inlined_call_operand.vmem [shape: f32[8,31], index: 6, kind: input, shape index: {}]
  %s7 = inlined_call_operand.vmem [shape: f32[31,8], index: 7, kind: input, shape index: {}]
  %s8 = inlined_call_operand.vmem [shape: f32[2,32,16], index: 8, kind: output, shape index: {}]
  %s9 = sld [smem:[#allocation0]]
  $region68: #{tpu_custom_call.1} parent=0
    _
  %s11 = ssub.s32 1, %s9
  %s12 = scalar_select 0, %s11, %s9
  %s13 = sshll.u32 %s0, 4
  %s14 = int_to_ptr.vmem [resolvable:$true] %s13
  %16 = dma.vmem_to_smem %s14, 16, [#allocation5], [#allocation4]
  %17 = dma.done [#allocation4], 16
  %18 = sfence
  loop: start=0, step=1, limit=4
  $region2: #{tpu_custom_call.1} parent=0 // loop_pre_header
    _
  $region3: #{tpu_custom_call.1} parent=0 // loop_header
    %s20 = sphi 0, %s24
    %p21 = scmp.ge.s32.totalorder %s20, 4
    %s30 = sphi 0, %s32
    %s33 = sphi 0, %s30
    %s34 = sphi 0, %s33
    %s50 = sphi 0, %s34
    %s54 = sphi 0, %s54
    %s56 = sphi 0, %s54
    %s57 = sphi 0, %s56
    %s71 = sphi 0, %s57
    %s75 = sphi 0, %s75
    %s77 = sphi 0, %s75
    %s78 = sphi 0, %s77
    %s92 = sphi 0, %s78
    %s96 = sphi 0, %s96
    %s98 = sphi 0, %s96
    %s99 = sphi 0, %s98
    %s113 = sphi 0, %s99
    %s117 = sphi 0, %s117
    %s119 = sphi 0, %s117
    %s120 = sphi 0, %s119
    %s134 = sphi 0, %s120
    %s138 = sphi 0, %s138
    %s140 = sphi 0, %s138
    %s141 = sphi 0, %s140
    %s155 = sphi 0, %s141
    %s159 = sphi 0, %s159
    %s161 = sphi 0, %s159
    %s162 = sphi 0, %s161
    %s176 = sphi 0, %s162
    %s182 = sphi 0, %s184
    %s185 = sphi 0, %s182
    %s186 = sphi 0, %s185
    %s202 = sphi 0, %s186
  $region4: #{tpu_custom_call.1} parent=0 // loop_header_branch
    %23 = sbr.rel (%p21) target = $region8
  $region5: #{tpu_custom_call.1} parent=0 // loop_body
    %s25 = ssub.s32 %s20, 1
    %s26 = ssub.s32 %s20, 2
    %s27 = sadd.s32 %s20, 1
    %s28 = ssub.s32 %s20, %s27
    %p29 = scmp.eq.s32.totalorder %s28, 0
    %s31 = sadd.s32 %s30, 1
    %s32 = scalar_select %p29, %s30, %s31
    %p35 = pneg %p29
    %p36 = scmp.eq.s32.totalorder %s20, 1
    %p37 = por %p35, %p36
    %p38 = scmp.ne.s32.totalorder %s30, %s33
    %p39 = scmp.eq.s32.totalorder %s20, 0
    %p40 = por %p38, %p39
    %p41 = scmp.ne.s32.totalorder %s30, %s33
    %p42 = scmp.eq.s32.totalorder %s25, 1
    %p43 = por %p41, %p42
    %p44 = scmp.ne.s32.totalorder %s33, %s34
    %p45 = scmp.eq.s32.totalorder %s25, 0
    %p46 = por %p44, %p45
    %p47 = scmp.ne.s32.totalorder %s33, %s34
    %p48 = scmp.eq.s32.totalorder %s26, 1
    %p49 = por %p47, %p48
    %p51 = scmp.ne.s32.totalorder %s34, %s50
    %p52 = scmp.eq.s32.totalorder %s26, 0
    %p53 = por %p51, %p52
    %s55 = sadd.s32 %s54, 1
    %p58 = scmp.eq.s32.totalorder %s20, 1
    %p59 = scmp.ne.s32.totalorder %s54, %s56
    %p60 = scmp.eq.s32.totalorder %s20, 0
    %p61 = por %p59, %p60
    %p62 = scmp.ne.s32.totalorder %s54, %s56
    %p63 = scmp.eq.s32.totalorder %s25, 1
    %p64 = por %p62, %p63
    %p65 = scmp.ne.s32.totalorder %s56, %s57
    %p66 = scmp.eq.s32.totalorder %s25, 0
    %p67 = por %p65, %p66
    %p68 = scmp.ne.s32.totalorder %s56, %s57
    %p69 = scmp.eq.s32.totalorder %s26, 1
    %p70 = por %p68, %p69
    %p72 = scmp.ne.s32.totalorder %s57, %s71
    %p73 = scmp.eq.s32.totalorder %s26, 0
    %p74 = por %p72, %p73
    %s76 = sadd.s32 %s75, 1
    %p79 = scmp.eq.s32.totalorder %s20, 1
    %p80 = scmp.ne.s32.totalorder %s75, %s77
    %p81 = scmp.eq.s32.totalorder %s20, 0
    %p82 = por %p80, %p81
    %p83 = scmp.ne.s32.totalorder %s75, %s77
    %p84 = scmp.eq.s32.totalorder %s25, 1
    %p85 = por %p83, %p84
    %p86 = scmp.ne.s32.totalorder %s77, %s78
    %p87 = scmp.eq.s32.totalorder %s25, 0
    %p88 = por %p86, %p87
    %p89 = scmp.ne.s32.totalorder %s77, %s78
    %p90 = scmp.eq.s32.totalorder %s26, 1
    %p91 = por %p89, %p90
    %p93 = scmp.ne.s32.totalorder %s78, %s92
    %p94 = scmp.eq.s32.totalorder %s26, 0
    %p95 = por %p93, %p94
    %s97 = sadd.s32 %s96, 1
    %p100 = scmp.eq.s32.totalorder %s20, 1
    %p101 = scmp.ne.s32.totalorder %s96, %s98
    %p102 = scmp.eq.s32.totalorder %s20, 0
    %p103 = por %p101, %p102
    %p104 = scmp.ne.s32.totalorder %s96, %s98
    %p105 = scmp.eq.s32.totalorder %s25, 1
    %p106 = por %p104, %p105
    %p107 = scmp.ne.s32.totalorder %s98, %s99
    %p108 = scmp.eq.s32.totalorder %s25, 0
    %p109 = por %p107, %p108
    %p110 = scmp.ne.s32.totalorder %s98, %s99
    %p111 = scmp.eq.s32.totalorder %s26, 1
    %p112 = por %p110, %p111
    %p114 = scmp.ne.s32.totalorder %s99, %s113
    %p115 = scmp.eq.s32.totalorder %s26, 0
    %p116 = por %p114, %p115
    %s118 = sadd.s32 %s117, 1
    %p121 = scmp.eq.s32.totalorder %s20, 1
    %p122 = scmp.ne.s32.totalorder %s117, %s119
    %p123 = scmp.eq.s32.totalorder %s20, 0
    %p124 = por %p122, %p123
    %p125 = scmp.ne.s32.totalorder %s117, %s119
    %p126 = scmp.eq.s32.totalorder %s25, 1
    %p127 = por %p125, %p126
    %p128 = scmp.ne.s32.totalorder %s119, %s120
    %p129 = scmp.eq.s32.totalorder %s25, 0
    %p130 = por %p128, %p129
    %p131 = scmp.ne.s32.totalorder %s119, %s120
    %p132 = scmp.eq.s32.totalorder %s26, 1
    %p133 = por %p131, %p132
    %p135 = scmp.ne.s32.totalorder %s120, %s134
    %p136 = scmp.eq.s32.totalorder %s26, 0
    %p137 = por %p135, %p136
    %s139 = sadd.s32 %s138, 1
    %p142 = scmp.eq.s32.totalorder %s20, 1
    %p143 = scmp.ne.s32.totalorder %s138, %s140
    %p144 = scmp.eq.s32.totalorder %s20, 0
    %p145 = por %p143, %p144
    %p146 = scmp.ne.s32.totalorder %s138, %s140
    %p147 = scmp.eq.s32.totalorder %s25, 1
    %p148 = por %p146, %p147
    %p149 = scmp.ne.s32.totalorder %s140, %s141
    %p150 = scmp.eq.s32.totalorder %s25, 0
    %p151 = por %p149, %p150
    %p152 = scmp.ne.s32.totalorder %s140, %s141
    %p153 = scmp.eq.s32.totalorder %s26, 1
    %p154 = por %p152, %p153
    %p156 = scmp.ne.s32.totalorder %s141, %s155
    %p157 = scmp.eq.s32.totalorder %s26, 0
    %p158 = por %p156, %p157
    %s160 = sadd.s32 %s159, 1
    %p163 = scmp.eq.s32.totalorder %s20, 1
    %p164 = scmp.ne.s32.totalorder %s159, %s161
    %p165 = scmp.eq.s32.totalorder %s20, 0
    %p166 = por %p164, %p165
    %p167 = scmp.ne.s32.totalorder %s159, %s161
    %p168 = scmp.eq.s32.totalorder %s25, 1
    %p169 = por %p167, %p168
    %p170 = scmp.ne.s32.totalorder %s161, %s162
    %p171 = scmp.eq.s32.totalorder %s25, 0
    %p172 = por %p170, %p171
    %p173 = scmp.ne.s32.totalorder %s161, %s162
    %p174 = scmp.eq.s32.totalorder %s26, 1
    %p175 = por %p173, %p174
    %p177 = scmp.ne.s32.totalorder %s162, %s176
    %p178 = scmp.eq.s32.totalorder %s26, 0
    %p179 = por %p177, %p178
    %s180 = ssub.s32 %s20, %s27
    %p181 = scmp.eq.s32.totalorder %s180, 0
    %s183 = sadd.s32 %s182, 1
    %s184 = scalar_select %p181, %s182, %s183
    %p187 = pneg %p181
    %p188 = scmp.eq.s32.totalorder %s20, 1
    %p189 = por %p187, %p188
    %p190 = scmp.ne.s32.totalorder %s182, %s185
    %p191 = scmp.eq.s32.totalorder %s20, 0
    %p192 = por %p190, %p191
    %p193 = scmp.ne.s32.totalorder %s182, %s185
    %p194 = scmp.eq.s32.totalorder %s25, 1
    %p195 = por %p193, %p194
    %p196 = scmp.ne.s32.totalorder %s185, %s186
    %p197 = scmp.eq.s32.totalorder %s25, 0
    %p198 = por %p196, %p197
    %p199 = scmp.ne.s32.totalorder %s185, %s186
    %p200 = scmp.eq.s32.totalorder %s26, 1
    %p201 = por %p199, %p200
    %p203 = scmp.ne.s32.totalorder %s186, %s202
    %p204 = scmp.eq.s32.totalorder %s26, 0
    %p205 = por %p203, %p204
    %p206 = scmp.le.s32.totalorder 1, %s20
    %p207 = scmp.lt.s32.totalorder %s20, 3
    %p208 = pnand %p206, %p207
    %p209 = pneg %p208
    // Predicated region
    $region9: #{tpu_custom_call.1} parent=5 // pred_check
      _
    $region10: #{tpu_custom_call.1} parent=5 // pred_check_branch
      %211 = sbr.rel (%p208) target = $region12
    $region11: #{tpu_custom_call.1} parent=5 // pred_region
      %s212 = ssub.s32 %s20, 1
      // Predicated region
      $region13: #{tpu_custom_call.1} parent=11 // pred_check
        %p213 = pneg %p67
      $region14: #{tpu_custom_call.1} parent=11 // pred_check_branch
        %215 = sbr.rel (%p213) target = $region16
      $region15: #{tpu_custom_call.1} parent=11 // pred_region
        _
      $region16: #{tpu_custom_call.1} parent=11 // pred_fallthru
        _
      // Predicated region
      $region17: #{tpu_custom_call.1} parent=11 // pred_check
        %p216 = pneg %p88
      $region18: #{tpu_custom_call.1} parent=11 // pred_check_branch
        %218 = sbr.rel (%p216) target = $region20
      $region19: #{tpu_custom_call.1} parent=11 // pred_region
        _
      $region20: #{tpu_custom_call.1} parent=11 // pred_fallthru
        _
      // Predicated region
      $region21: #{tpu_custom_call.1} parent=11 // pred_check
        %p219 = pneg %p109
      $region22: #{tpu_custom_call.1} parent=11 // pred_check_branch
        %221 = sbr.rel (%p219) target = $region24
      $region23: #{tpu_custom_call.1} parent=11 // pred_region
        _
      $region24: #{tpu_custom_call.1} parent=11 // pred_fallthru
        _
      // Predicated region
      $region25: #{tpu_custom_call.1} parent=11 // pred_check
        %p222 = pneg %p130
      $region26: #{tpu_custom_call.1} parent=11 // pred_check_branch
        %224 = sbr.rel (%p222) target = $region28
      $region27: #{tpu_custom_call.1} parent=11 // pred_region
        _
      $region28: #{tpu_custom_call.1} parent=11 // pred_fallthru
        _
      // Predicated region
      $region29: #{tpu_custom_call.1} parent=11 // pred_check
        %p225 = pneg %p151
      $region30: #{tpu_custom_call.1} parent=11 // pred_check_branch
        %227 = sbr.rel (%p225) target = $region32
      $region31: #{tpu_custom_call.1} parent=11 // pred_region
        _
      $region32: #{tpu_custom_call.1} parent=11 // pred_fallthru
        _
      // Predicated region
      $region33: #{tpu_custom_call.1} parent=11 // pred_check
        %p228 = pneg %p172
      $region34: #{tpu_custom_call.1} parent=11 // pred_check_branch
        %230 = sbr.rel (%p228) target = $region36
      $region35: #{tpu_custom_call.1} parent=11 // pred_region
        _
      $region36: #{tpu_custom_call.1} parent=11 // pred_fallthru
        _
    $region12: #{tpu_custom_call.1} parent=5 // pred_fallthru
      _
    %p231 = scmp.lt.s32.totalorder %s20, 2
    // Predicated region
    $region37: #{tpu_custom_call.1} parent=5 // pred_check
      %p232 = pneg %p231
    $region38: #{tpu_custom_call.1} parent=5 // pred_check_branch
      %234 = sbr.rel (%p232) target = $region40
    $region39: #{tpu_custom_call.1} parent=5 // pred_region
      // Predicated region
      $region41: #{tpu_custom_call.1} parent=39 // pred_check
        %p235 = pneg %p40
      $region42: #{tpu_custom_call.1} parent=39 // pred_check_branch
        %237 = sbr.rel (%p235) target = $region44
      $region43: #{tpu_custom_call.1} parent=39 // pred_region
        %p238 = scmp.lt.s32.totalorder %s20, 1
        %s239 = scalar_select %p238, %s20, 1
        %s240 = smul.addr %s239, 4
        %s241 = smul.addr %s240, 8
        %s242 = scalar_lea.vmem %s1, %s241
      $region44: #{tpu_custom_call.1} parent=39 // pred_fallthru
        _
    $region40: #{tpu_custom_call.1} parent=5 // pred_fallthru
      _
    %p243 = scmp.le.s32.totalorder 1, %s20
    %p244 = scmp.lt.s32.totalorder %s20, 3
    %p245 = pnand %p243, %p244
    %p246 = pneg %p245
    // Predicated region
    $region45: #{tpu_custom_call.1} parent=5 // pred_check
      _
    $region46: #{tpu_custom_call.1} parent=5 // pred_check_branch
      %248 = sbr.rel (%p245) target = $region48
    $region47: #{tpu_custom_call.1} parent=5 // pred_region
      %s249 = ssub.s32 %s20, 1
      %p250 = scmp.lt.s32.totalorder %s25, 1
      %s251 = scalar_select %p250, %s25, 1
      %s252 = smul.addr %s251, 4
      %s253 = smul.addr %s252, 8
      %s254 = scalar_lea.vmem %s1, %s253
      %p255 = pneg %p46
      %p256 = pneg %p43
      %p257 = pneg %p67
      %p258 = pneg %p64
      %p259 = pneg %p88
      %p260 = pneg %p85
      %p261 = pneg %p109
      %p262 = pneg %p106
      %p263 = pneg %p130
      %p264 = pneg %p127
      %p265 = pneg %p151
      %p266 = pneg %p148
      %p267 = pneg %p172
      %p268 = pneg %p169
      %p269 = pneg %p198
      %p270 = pneg %p195
      %p271 = scmp.lt.s32.totalorder %s25, 1
      %s272 = scalar_select %p271, %s25, 1
      %s273 = smul.addr %s272, 4
      %s274 = smul.addr %s273, 8
      %s275 = scalar_lea.vmem %s8, %s274
      %p276 = scmp.lt.s32.totalorder %s25, 1
      %s277 = scalar_select %p276, %s25, 1
      %s278 = smul.addr %s277, 4
      %s279 = smul.addr %s278, 8
      %s280 = scalar_lea.vmem %s1, %s279
      %p281 = scmp.lt.s32.totalorder %s25, 1
      %s282 = scalar_select %p281, %s25, 1
      %s283 = smul.addr %s282, 4
      %s284 = smul.addr %s283, 8
      %s285 = scalar_lea.vmem %s8, %s284
      %v286 = vld [vmem:[%s280] sm:$0xff]
      %v287 = vld [vmem:[%s280 + $0x8] sm:$0xff]
      %v288 = vld [vmem:[%s280 + $0x10] sm:$0xff]
      %v289 = vld [vmem:[%s280 + $0x18] sm:$0xff]
      %v290 = vld [vmem:[%s2] sm:$0xff]
      %v291 = vld [vmem:[%s2 + $0x8] sm:$0xff]
      %v292 = vld [vmem:[%s2 + $0x10] sm:$0xff]
      %v293 = vld [vmem:[%s2 + $0x18] sm:$0xff]
      %v294 = vld [vmem:[%s2 + $0x20] sm:$0xff]
      %v295 = vld [vmem:[%s2 + $0x28] sm:$0xff]
      %v296 = vld [vmem:[%s2 + $0x30] sm:$0xff]
      %v297 = vld [vmem:[%s2 + $0x38] sm:$0xff]
      %v298 = vld [vmem:[%s2 + $0x40] sm:$0xff]
      %v299 = vld [vmem:[%s2 + $0x48] sm:$0xff]
      %v300 = vld [vmem:[%s2 + $0x50] sm:$0xff]
      %v301 = vld [vmem:[%s2 + $0x58] sm:$0xff]
      %v302 = vld [vmem:[%s3] sm:$0xff]
      %v303 = vld [vmem:[%s3 + $0x8] sm:$0xff]
      %v304 = vld [vmem:[%s3 + $0x10] sm:$0xff]
      %v305 = vld [vmem:[%s3 + $0x18] sm:$0xff]
      %v306 = vld [vmem:[%s3 + $0x20] sm:$0xff]
      %v307 = vld [vmem:[%s3 + $0x28] sm:$0xff]
      %v308 = vld [vmem:[%s3 + $0x30] sm:$0xff]
      %v309 = vld [vmem:[%s3 + $0x38] sm:$0xff]
      %v310 = vld [vmem:[%s3 + $0x40] sm:$0xff]
      %v311 = vld [vmem:[%s3 + $0x48] sm:$0xff]
      %v312 = vld [vmem:[%s3 + $0x50] sm:$0xff]
      %v313 = vld [vmem:[%s3 + $0x58] sm:$0xff]
      %315 = vset.pattern.permute.xlu0 0
      %316 = vperm.xlu0 %315, %v302
      %v317 = vpop.permute.xlu0 %316
      %320 = vset.pattern.permute.xlu0 0
      %321 = vperm.xlu0 %320, %v303
      %v322 = vpop.permute.xlu0 %321
      %325 = vset.pattern.permute.xlu0 0
      %326 = vperm.xlu0 %325, %v304
      %v327 = vpop.permute.xlu0 %326
      %330 = vset.pattern.permute.xlu0 0
      %331 = vperm.xlu0 %330, %v305
      %v332 = vpop.permute.xlu0 %331
      %335 = vset.pattern.permute.xlu0 0
      %336 = vperm.xlu0 %335, %v306
      %v337 = vpop.permute.xlu0 %336
      %340 = vset.pattern.permute.xlu0 0
      %341 = vperm.xlu0 %340, %v307
      %v342 = vpop.permute.xlu0 %341
      %345 = vset.pattern.permute.xlu0 0
      %346 = vperm.xlu0 %345, %v308
      %v347 = vpop.permute.xlu0 %346
      %350 = vset.pattern.permute.xlu0 0
      %351 = vperm.xlu0 %350, %v309
      %v352 = vpop.permute.xlu0 %351
      %355 = vset.pattern.permute.xlu0 0
      %356 = vperm.xlu0 %355, %v310
      %v357 = vpop.permute.xlu0 %356
      %360 = vset.pattern.permute.xlu0 0
      %361 = vperm.xlu0 %360, %v311
      %v362 = vpop.permute.xlu0 %361
      %365 = vset.pattern.permute.xlu0 0
      %366 = vperm.xlu0 %365, %v312
      %v367 = vpop.permute.xlu0 %366
      %370 = vset.pattern.permute.xlu0 0
      %371 = vperm.xlu0 %370, %v313
      %v372 = vpop.permute.xlu0 %371
      %vm374 = vcmask 261120
      %v376 = vsel %vm374, %v290, 0
      %v379 = vsel %vm374, %v291, 0
      %v382 = vsel %vm374, %v292, 0
      %v385 = vsel %vm374, %v293, 0
      %v388 = vsel %vm374, %v294, 0
      %v391 = vsel %vm374, %v295, 0
      %v394 = vsel %vm374, %v296, 0
      %v397 = vsel %vm374, %v297, 0
      %v400 = vsel %vm374, %v298, 0
      %v403 = vsel %vm374, %v299, 0
      %v406 = vsel %vm374, %v300, 0
      %v409 = vsel %vm374, %v301, 0
      %411 = vmatprep.subr.mxu0 0.0
      %412 = vmatpush1.msra.mxu0 0.0
      %413 = vmatprep.subr.mxu0 0.0
      %414 = vmatpush1.msra.mxu0 0.0
      %415 = vmatprep.subr.mxu0 0.0
      %416 = vmatpush1.msra.mxu0 0.0
      %417 = vmatprep.subr.mxu0 0.0
      %418 = vmatpush1.msra.mxu0 0.0
      %419 = vmatprep.subr.mxu0 0.0
      %420 = vmatpush1.msra.mxu0 0.0
      %421 = vmatprep.subr.mxu0 0.0
      %422 = vmatpush1.msra.mxu0 0.0
      %423 = vmatprep.subr.mxu0 0.0
      %424 = vmatpush1.msra.mxu0 0.0
      %425 = vmatprep.subr.mxu0 0.0
      %426 = vmatpush1.msra.mxu0 0.0
      %427 = vmatprep.subr.mxu0 0.0
      %428 = vmatpush1.msra.mxu0 0.0
      %429 = vmatprep.subr.mxu0 0.0
      %430 = vmatpush1.msra.mxu0 0.0
      %431 = vmatprep.subr.mxu0 0.0
      %432 = vmatpush1.msra.mxu0 0.0
      %433 = vmatprep.subr.mxu0 0.0
      %434 = vmatpush1.msra.mxu0 0.0
      %435 = vmatprep.subr.mxu0 0.0
      %436 = vmatpush1.msra.mxu0 %v289
      %437 = vmatprep.subr.mxu0 0.0
      %438 = vmatpush1.msra.mxu0 %v288
      %439 = vmatprep.subr.mxu0 0.0
      %440 = vmatpush1.msra.mxu0 %v287
      %441 = vmatprep.subr.mxu0 0.0
      %442 = vmatpush1.msra.mxu0 %v286
      %443 = vmatprep.subr.mxu0 0.0
      %444 = vmatpush2.msra.mxu0 0.0
      %445 = vmatprep.subr.mxu0 0.0
      %446 = vmatpush2.msra.mxu0 0.0
      %447 = vmatprep.subr.mxu0 0.0
      %448 = vmatpush2.msra.mxu0 0.0
      %449 = vmatprep.subr.mxu0 0.0
      %450 = vmatpush2.msra.mxu0 0.0
      %451 = vmatprep.subr.mxu0 0.0
      %452 = vmatpush2.msra.mxu0 0.0
      %453 = vmatprep.subr.mxu0 0.0
      %454 = vmatpush2.msra.mxu0 0.0
      %455 = vmatprep.subr.mxu0 0.0
      %456 = vmatpush2.msra.mxu0 0.0
      %457 = vmatprep.subr.mxu0 0.0
      %458 = vmatpush2.msra.mxu0 0.0
      %459 = vmatprep.subr.mxu0 0.0
      %460 = vmatpush2.msra.mxu0 0.0
      %461 = vmatprep.subr.mxu0 0.0
      %462 = vmatpush2.msra.mxu0 0.0
      %463 = vmatprep.subr.mxu0 0.0
      %464 = vmatpush2.msra.mxu0 0.0
      %465 = vmatprep.subr.mxu0 0.0
      %466 = vmatpush2.msra.mxu0 0.0
      %467 = vmatprep.subr.mxu0 0.0
      %468 = vmatpush2.msra.mxu0 0.0
      %469 = vmatprep.subr.mxu0 0.0
      %470 = vmatpush2.msra.mxu0 0.0
      %471 = vmatprep.subr.mxu0 0.0
      %472 = vmatpush2.msra.mxu0 0.0
      %473 = vmatprep.subr.mxu0 0.0
      %474 = vmatpush2.msra.mxu0 0.0
      %475 = vmatprep.mubr.f32.mxu0 0.0
      %476 = vmatmul.mubr.f32.gmra.mxu0 %v376
      %v477 = vpop.f32.mrf.mxu0
      %v478 = vadd.f32 %v317, %v477
      %v479 = vpop.f32.mrf.mxu0
      %480 = vmatprep.mubr.f32.mxu0 0.0
      %481 = vmatmul.mubr.f32.gmra.mxu0 %v379
      %v482 = vpop.f32.mrf.mxu0
      %v483 = vadd.f32 %v322, %v482
      %v484 = vpop.f32.mrf.mxu0
      %485 = vmatprep.mubr.f32.mxu0 0.0
      %486 = vmatmul.mubr.f32.gmra.mxu0 %v382
      %v487 = vpop.f32.mrf.mxu0
      %v488 = vadd.f32 %v327, %v487
      %v489 = vpop.f32.mrf.mxu0
      %490 = vmatprep.mubr.f32.mxu0 0.0
      %491 = vmatmul.mubr.f32.gmra.mxu0 %v385
      %v492 = vpop.f32.mrf.mxu0
      %v493 = vadd.f32 %v332, %v492
      %v494 = vpop.f32.mrf.mxu0
      %495 = vmatprep.mubr.f32.mxu0 0.0
      %496 = vmatmul.mubr.f32.gmra.mxu0 %v388
      %v497 = vpop.f32.mrf.mxu0
      %v498 = vadd.f32 %v337, %v497
      %v499 = vpop.f32.mrf.mxu0
      %500 = vmatprep.mubr.f32.mxu0 0.0
      %501 = vmatmul.mubr.f32.gmra.mxu0 %v391
      %v502 = vpop.f32.mrf.mxu0
      %v503 = vadd.f32 %v342, %v502
      %v504 = vpop.f32.mrf.mxu0
      %505 = vmatprep.mubr.f32.mxu0 0.0
      %506 = vmatmul.mubr.f32.gmra.mxu0 %v394
      %v507 = vpop.f32.mrf.mxu0
      %v508 = vadd.f32 %v347, %v507
      %v509 = vpop.f32.mrf.mxu0
      %510 = vmatprep.mubr.f32.mxu0 0.0
      %511 = vmatmul.mubr.f32.gmra.mxu0 %v397
      %v512 = vpop.f32.mrf.mxu0
      %v513 = vadd.f32 %v352, %v512
      %v514 = vpop.f32.mrf.mxu0
      %515 = vmatprep.mubr.f32.mxu0 0.0
      %516 = vmatmul.mubr.f32.gmra.mxu0 %v400
      %v517 = vpop.f32.mrf.mxu0
      %v518 = vadd.f32 %v357, %v517
      %v519 = vpop.f32.mrf.mxu0
      %520 = vmatprep.mubr.f32.mxu0 0.0
      %521 = vmatmul.mubr.f32.gmra.mxu0 %v403
      %v522 = vpop.f32.mrf.mxu0
      %v523 = vadd.f32 %v362, %v522
      %v524 = vpop.f32.mrf.mxu0
      %525 = vmatprep.mubr.f32.mxu0 0.0
      %526 = vmatmul.mubr.f32.gmra.mxu0 %v406
      %v527 = vpop.f32.mrf.mxu0
      %v528 = vadd.f32 %v367, %v527
      %v529 = vpop.f32.mrf.mxu0
      %530 = vmatprep.mubr.f32.mxu0 0.0
      %531 = vmatmul.mubr.f32.gmra.mxu0 %v409
      %v532 = vpop.f32.mrf.mxu0
      %v533 = vadd.f32 %v372, %v532
      %v534 = vpop.f32.mrf.mxu0
      %535 = vdwg.mxu0
      %vm536 = vcmask 130048
      %537 = vst.msk [vmem:[#allocation2] sm:$0xff] %vm536, %v478
      %538 = vst.msk [vmem:[#allocation2 + $0x8] sm:$0xff] %vm536, %v483
      %539 = vst.msk [vmem:[#allocation2 + $0x10] sm:$0xff] %vm536, %v488
      %540 = vst.msk [vmem:[#allocation2 + $0x18] sm:$0xff] %vm536, %v493
      %541 = vst.msk [vmem:[#allocation2 + $0x20] sm:$0xff] %vm536, %v498
      %542 = vst.msk [vmem:[#allocation2 + $0x28] sm:$0xff] %vm536, %v503
      %543 = vst.msk [vmem:[#allocation2 + $0x30] sm:$0xff] %vm536, %v508
      %544 = vst.msk [vmem:[#allocation2 + $0x38] sm:$0xff] %vm536, %v513
      %545 = vst.msk [vmem:[#allocation2 + $0x40] sm:$0xff] %vm536, %v518
      %546 = vst.msk [vmem:[#allocation2 + $0x48] sm:$0xff] %vm536, %v523
      %547 = vst.msk [vmem:[#allocation2 + $0x50] sm:$0xff] %vm536, %v528
      %548 = vst.msk [vmem:[#allocation2 + $0x58] sm:$0xff] %vm536, %v533
      %s549 = sld [smem:[#allocation5 + %s25]]
      %v550 = vlaneseq
      %v551 = vshrl.u32 %v550, 7
      %v552 = vadd.s32 %v551, 8
      %v553 = vlaneseq
      %v554 = vand.u32 %v553, 127
      %v555 = vstv %s549
      %vm556 = vcmp.lt.s32.totalorder %v551, %v555
      %vm557 = vcmp.lt.s32.totalorder %v552, %v555
      %vm558 = vcmp.lt.s32.totalorder %v554, %v555
      %vm559 = vmand %vm556, %vm558
      %vm560 = vmand %vm557, %vm558
      %v561 = vld [vmem:[%s6] sm:$0xff]
      %v562 = vld [vmem:[%s7] sm:$0xff]
      %v563 = vld [vmem:[%s7 + $0x8] sm:$0xff]
      %v564 = vld [vmem:[%s7 + $0x10] sm:$0xff]
      %v565 = vld [vmem:[%s7 + $0x18] sm:$0x7f]
      loop: start=0, step=1, limit=4
      $region49: #{tpu_custom_call.1} parent=47 // loop_pre_header
        _
      $region50: #{tpu_custom_call.1} parent=47 // loop_header
        %s567 = sphi 0, %s571
        %p568 = scmp.ge.s32.totalorder %s567, 4
      $region51: #{tpu_custom_call.1} parent=47 // loop_header_branch
        %570 = sbr.rel (%p568) target = $region55
      $region52: #{tpu_custom_call.1} parent=47 // loop_body
        %s572 = smul.u32 %s567, 8
        %s573 = scalar_lea.vmem [#allocation2], %s572
        %v574 = vld [vmem:[%s573] sm:$0xff]
        %v575 = vmul.f32 %v574, 0.35355338
        %s576 = sadd.s32 %s572, 32
        %s577 = scalar_lea.vmem [#allocation2], %s576
        %v578 = vld [vmem:[%s577] sm:$0xff]
        %s579 = sadd.s32 %s572, 64
        %s580 = scalar_lea.vmem [#allocation2], %s579
        %v581 = vld [vmem:[%s580] sm:$0xff]
        %582 = vxpose.xlu0.b32.start [1/16] %v575, 128
        %583 = vxpose.xlu0.b32.cont [2/16] 0.0, 128
        %584 = vxpose.xlu0.b32.cont [3/16] 0.0, 128
        %585 = vxpose.xlu0.b32.cont [4/16] 0.0, 128
        %586 = vxpose.xlu0.b32.cont [5/16] 0.0, 128
        %587 = vxpose.xlu0.b32.cont [6/16] 0.0, 128
        %588 = vxpose.xlu0.b32.cont [7/16] 0.0, 128
        %589 = vxpose.xlu0.b32.cont [8/16] 0.0, 128
        %590 = vxpose.xlu0.b32.cont [9/16] 0.0, 128
        %591 = vxpose.xlu0.b32.cont [10/16] 0.0, 128
        %592 = vxpose.xlu0.b32.cont [11/16] 0.0, 128
        %593 = vxpose.xlu0.b32.cont [12/16] 0.0, 128
        %594 = vxpose.xlu0.b32.cont [13/16] 0.0, 128
        %595 = vxpose.xlu0.b32.cont [14/16] 0.0, 128
        %596 = vxpose.xlu0.b32.cont [15/16] 0.0, 128
        %597 = vxpose.xlu0.b32.end [16/16] 0.0, 128
        %v598 = vpop.trf.xlu0
        %v599 = vpop.trf.xlu0
        %v600 = vpop.trf.xlu0
        %v601 = vpop.trf.xlu0
        %v602 = vpop.trf.xlu0
        %v603 = vpop.trf.xlu0
        %v604 = vpop.trf.xlu0
        %v605 = vpop.trf.xlu0
        %v606 = vpop.trf.xlu0
        %v607 = vpop.trf.xlu0
        %v608 = vpop.trf.xlu0
        %v609 = vpop.trf.xlu0
        %v610 = vpop.trf.xlu0
        %v611 = vpop.trf.xlu0
        %v612 = vpop.trf.xlu0
        %v613 = vpop.trf.xlu0
        %vm614 = vcmask 64512
        %v616 = vsel %vm614, %v598, 0
        %v619 = vsel %vm614, %v599, 0
        %621 = vmatprep.subr.mxu0 0.0
        %622 = vmatpush1.msra.mxu0 0.0
        %623 = vmatprep.subr.mxu0 0.0
        %624 = vmatpush1.msra.mxu0 0.0
        %625 = vmatprep.subr.mxu0 0.0
        %626 = vmatpush1.msra.mxu0 0.0
        %627 = vmatprep.subr.mxu0 0.0
        %628 = vmatpush1.msra.mxu0 0.0
        %629 = vmatprep.subr.mxu0 0.0
        %630 = vmatpush1.msra.mxu0 0.0
        %631 = vmatprep.subr.mxu0 0.0
        %632 = vmatpush1.msra.mxu0 0.0
        %633 = vmatprep.subr.mxu0 0.0
        %634 = vmatpush1.msra.mxu0 0.0
        %635 = vmatprep.subr.mxu0 0.0
        %636 = vmatpush1.msra.mxu0 0.0
        %637 = vmatprep.subr.mxu0 0.0
        %638 = vmatpush1.msra.mxu0 0.0
        %639 = vmatprep.subr.mxu0 0.0
        %640 = vmatpush1.msra.mxu0 0.0
        %641 = vmatprep.subr.mxu0 0.0
        %642 = vmatpush1.msra.mxu0 0.0
        %643 = vmatprep.subr.mxu0 0.0
        %644 = vmatpush1.msra.mxu0 0.0
        %645 = vmatprep.subr.mxu0 0.0
        %646 = vmatpush1.msra.mxu0 0.0
        %647 = vmatprep.subr.mxu0 0.0
        %648 = vmatpush1.msra.mxu0 0.0
        %649 = vmatprep.subr.mxu0 0.0
        %650 = vmatpush1.msra.mxu0 0.0
        %651 = vmatprep.subr.mxu0 0.0
        %652 = vmatpush1.msra.mxu0 %v561
        %653 = vmatprep.subr.mxu0 0.0
        %654 = vmatpush2.msra.mxu0 0.0
        %655 = vmatprep.subr.mxu0 0.0
        %656 = vmatpush2.msra.mxu0 0.0
        %657 = vmatprep.subr.mxu0 0.0
        %658 = vmatpush2.msra.mxu0 0.0
        %659 = vmatprep.subr.mxu0 0.0
        %660 = vmatpush2.msra.mxu0 0.0
        %661 = vmatprep.subr.mxu0 0.0
        %662 = vmatpush2.msra.mxu0 0.0
        %663 = vmatprep.subr.mxu0 0.0
        %664 = vmatpush2.msra.mxu0 0.0
        %665 = vmatprep.subr.mxu0 0.0
        %666 = vmatpush2.msra.mxu0 0.0
        %667 = vmatprep.subr.mxu0 0.0
        %668 = vmatpush2.msra.mxu0 0.0
        %669 = vmatprep.subr.mxu0 0.0
        %670 = vmatpush2.msra.mxu0 0.0
        %671 = vmatprep.subr.mxu0 0.0
        %672 = vmatpush2.msra.mxu0 0.0
        %673 = vmatprep.subr.mxu0 0.0
        %674 = vmatpush2.msra.mxu0 0.0
        %675 = vmatprep.subr.mxu0 0.0
        %676 = vmatpush2.msra.mxu0 0.0
        %677 = vmatprep.subr.mxu0 0.0
        %678 = vmatpush2.msra.mxu0 0.0
        %679 = vmatprep.subr.mxu0 0.0
        %680 = vmatpush2.msra.mxu0 0.0
        %681 = vmatprep.subr.mxu0 0.0
        %682 = vmatpush2.msra.mxu0 0.0
        %683 = vmatprep.subr.mxu0 0.0
        %684 = vmatpush2.msra.mxu0 0.0
        %685 = vmatprep.mubr.f32.mxu0 0.0
        %686 = vmatmul.mubr.f32.gmra.mxu0 %v616
        %v687 = vpop.f32.mrf.mxu0
        %v688 = vadd.f32 0.0, %v687
        %v689 = vpop.f32.mrf.mxu0
        %690 = vmatprep.mubr.f32.mxu0 0.0
        %691 = vmatmul.mubr.f32.gmra.mxu0 %v619
        %v692 = vpop.f32.mrf.mxu0
        %v693 = vadd.f32 0.0, %v692
        %v694 = vpop.f32.mrf.mxu0
        %695 = vdwg.mxu0
        %698 = vrot.lane.b32.xlu0 %v688, 98
        %v699 = vpop.permute.xlu0 %698
        %700 = vrot.lane.b32.xlu0 %v693, 98
        %v701 = vpop.permute.xlu0 %700
        %704 = vrot.lane.b32.xlu0 %v688, 1
        %v705 = vpop.permute.xlu0 %704
        %706 = vrot.lane.b32.xlu0 %v693, 1
        %v707 = vpop.permute.xlu0 %706
        %vm710 = vcmask 7168
        %v711 = vsel %vm710, %v699, %v705
        %v712 = vsel %vm710, %v701, %v707
        %v713 = vand.u32 %v551, 1
        %v714 = vand.u32 %v552, 1
        %vm715 = vcmp.ne.s32.totalorder %v713, 0
        %vm716 = vcmp.ne.s32.totalorder %v714, 0
        %v717 = vsel %vm715, %v711, %v688
        %v718 = vsel %vm716, %v712, %v693
        %721 = vrot.lane.b32.xlu0 %v717, 99
        %v722 = vpop.permute.xlu0 %721
        %723 = vrot.lane.b32.xlu0 %v718, 99
        %v724 = vpop.permute.xlu0 %723
        %727 = vrot.lane.b32.xlu0 %v717, 2
        %v728 = vpop.permute.xlu0 %727
        %729 = vrot.lane.b32.xlu0 %v718, 2
        %v730 = vpop.permute.xlu0 %729
        %vm733 = vcmask 15360
        %v734 = vsel %vm733, %v722, %v728
        %v735 = vsel %vm733, %v724, %v730
        %v736 = vand.u32 %v551, 2
        %v737 = vand.u32 %v552, 2
        %vm738 = vcmp.ne.s32.totalorder %v736, 0
        %vm739 = vcmp.ne.s32.totalorder %v737, 0
        %v740 = vsel %vm738, %v734, %v717
        %v741 = vsel %vm739, %v735, %v718
        %744 = vrot.lane.b32.xlu0 %v740, 101
        %v745 = vpop.permute.xlu0 %744
        %746 = vrot.lane.b32.xlu0 %v741, 101
        %v747 = vpop.permute.xlu0 %746
        %750 = vrot.lane.b32.xlu0 %v740, 4
        %v751 = vpop.permute.xlu0 %750
        %752 = vrot.lane.b32.xlu0 %v741, 4
        %v753 = vpop.permute.xlu0 %752
        %vm756 = vcmask 31744
        %v757 = vsel %vm756, %v745, %v751
        %v758 = vsel %vm756, %v747, %v753
        %v759 = vand.u32 %v551, 4
        %v760 = vand.u32 %v552, 4
        %vm761 = vcmp.ne.s32.totalorder %v759, 0
        %vm762 = vcmp.ne.s32.totalorder %v760, 0
        %v763 = vsel %vm761, %v757, %v740
        %v764 = vsel %vm762, %v758, %v741
        %767 = vrot.lane.b32.xlu0 %v763, 105
        %v768 = vpop.permute.xlu0 %767
        %769 = vrot.lane.b32.xlu0 %v764, 105
        %v770 = vpop.permute.xlu0 %769
        %773 = vrot.lane.b32.xlu0 %v763, 8
        %v774 = vpop.permute.xlu0 %773
        %775 = vrot.lane.b32.xlu0 %v764, 8
        %v776 = vpop.permute.xlu0 %775
        %v779 = vsel %vm614, %v768, %v774
        %v780 = vsel %vm614, %v770, %v776
        %v781 = vand.u32 %v551, 8
        %v782 = vand.u32 %v552, 8
        %vm783 = vcmp.ne.s32.totalorder %v781, 0
        %vm784 = vcmp.ne.s32.totalorder %v782, 0
        %v785 = vsel %vm783, %v779, %v763
        %v786 = vsel %vm784, %v780, %v764
        %789 = vrot.lane.b32.xlu0 %v785, 113
        %v790 = vpop.permute.xlu0 %789
        %791 = vrot.lane.b32.xlu0 %v786, 113
        %v792 = vpop.permute.xlu0 %791
        %795 = vmatprep.subr.mxu0 0.0
        %796 = vmatpush1.msra.mxu0 0.0
        %797 = vmatprep.subr.mxu0 0.0
        %798 = vmatpush1.msra.mxu0 0.0
        %799 = vmatprep.subr.mxu0 0.0
        %800 = vmatpush1.msra.mxu0 0.0
        %801 = vmatprep.subr.mxu0 0.0
        %802 = vmatpush1.msra.mxu0 0.0
        %803 = vmatprep.subr.mxu0 0.0
        %804 = vmatpush1.msra.mxu0 0.0
        %805 = vmatprep.subr.mxu0 0.0
        %806 = vmatpush1.msra.mxu0 0.0
        %807 = vmatprep.subr.mxu0 0.0
        %808 = vmatpush1.msra.mxu0 0.0
        %809 = vmatprep.subr.mxu0 0.0
        %810 = vmatpush1.msra.mxu0 0.0
        %811 = vmatprep.subr.mxu0 0.0
        %812 = vmatpush1.msra.mxu0 0.0
        %813 = vmatprep.subr.mxu0 0.0
        %814 = vmatpush1.msra.mxu0 0.0
        %815 = vmatprep.subr.mxu0 0.0
        %816 = vmatpush1.msra.mxu0 0.0
        %817 = vmatprep.subr.mxu0 0.0
        %818 = vmatpush1.msra.mxu0 0.0
        %819 = vmatprep.subr.mxu0 0.0
        %820 = vmatpush1.msra.mxu0 0.0
        %821 = vmatprep.subr.mxu0 0.0
        %822 = vmatpush1.msra.mxu0 0.0
        %823 = vmatprep.subr.mxu0 0.0
        %824 = vmatpush1.msra.mxu0 0.0
        %825 = vmatprep.subr.mxu0 0.0
        %826 = vmatpush1.msra.mxu0 %v578
        %827 = vmatprep.subr.mxu0 0.0
        %828 = vmatpush2.msra.mxu0 0.0
        %829 = vmatprep.subr.mxu0 0.0
        %830 = vmatpush2.msra.mxu0 0.0
        %831 = vmatprep.subr.mxu0 0.0
        %832 = vmatpush2.msra.mxu0 0.0
        %833 = vmatprep.subr.mxu0 0.0
        %834 = vmatpush2.msra.mxu0 0.0
        %835 = vmatprep.subr.mxu0 0.0
        %836 = vmatpush2.msra.mxu0 0.0
        %837 = vmatprep.subr.mxu0 0.0
        %838 = vmatpush2.msra.mxu0 0.0
        %839 = vmatprep.subr.mxu0 0.0
        %840 = vmatpush2.msra.mxu0 0.0
        %841 = vmatprep.subr.mxu0 0.0
        %842 = vmatpush2.msra.mxu0 0.0
        %843 = vmatprep.subr.mxu0 0.0
        %844 = vmatpush2.msra.mxu0 0.0
        %845 = vmatprep.subr.mxu0 0.0
        %846 = vmatpush2.msra.mxu0 0.0
        %847 = vmatprep.subr.mxu0 0.0
        %848 = vmatpush2.msra.mxu0 0.0
        %849 = vmatprep.subr.mxu0 0.0
        %850 = vmatpush2.msra.mxu0 0.0
        %851 = vmatprep.subr.mxu0 0.0
        %852 = vmatpush2.msra.mxu0 0.0
        %853 = vmatprep.subr.mxu0 0.0
        %854 = vmatpush2.msra.mxu0 0.0
        %855 = vmatprep.subr.mxu0 0.0
        %856 = vmatpush2.msra.mxu0 0.0
        %857 = vmatprep.subr.mxu0 0.0
        %858 = vmatpush2.msra.mxu0 0.0
        %859 = vmatprep.mubr.f32.mxu0 0.0
        %860 = vmatmul.mubr.f32.gmra.mxu0 %v616
        %v861 = vpop.f32.mrf.mxu0
        %v862 = vadd.f32 %v790, %v861
        %v863 = vpop.f32.mrf.mxu0
        %864 = vmatprep.mubr.f32.mxu0 0.0
        %865 = vmatmul.mubr.f32.gmra.mxu0 %v619
        %v866 = vpop.f32.mrf.mxu0
        %v867 = vadd.f32 %v792, %v866
        %v868 = vpop.f32.mrf.mxu0
        %869 = vdwg.mxu0
        %v870 = vsel %vm559, %v862, -10000.0
        %v871 = vsel %vm560, %v867, -10000.0
        %v872 = vsel %vm536, %v870, -inf
        %873 = vmax.xlane.f32.xlu0 %v872
        %v874 = vpop.xlane.xlu0 %873
        %v875 = vsel %vm536, %v871, -inf
        %876 = vmax.xlane.f32.xlu0 %v875
        %v877 = vpop.xlane.xlu0 %876
        %v878 = vsub.f32 %v870, %v874
        %v879 = vsub.f32 %v871, %v877
        %v880 = vmul.f32 %v878, 1.442695
        %v881 = vpow.pop %v880
        %v882 = vmul.f32 %v879, 1.442695
        %v883 = vpow.pop %v882
        %v884 = vsel %vm536, %v881, 0.0
        %885 = vadd.xlane.f32.xlu0 %v884
        %v886 = vpop.xlane.xlu0 %885
        %v887 = vsel %vm536, %v883, 0.0
        %888 = vadd.xlane.f32.xlu0 %v887
        %v889 = vpop.xlane.xlu0 %888
        %v890 = vrcp.pop %v886
        %v891 = vrcp.pop %v889
        %v892 = vmul.f32 %v886, %v890
        %v893 = vmul.f32 %v889, %v891
        %v894 = vsub.f32 2.0, %v892
        %v895 = vsub.f32 2.0, %v893
        %v896 = vmul.f32 %v890, %v894
        %v897 = vmul.f32 %v891, %v895
        %v898 = vmul.f32 %v881, %v896
        %v899 = vmul.f32 %v883, %v897
        %902 = vrot.lane.b32.xlu0 %v898, 15
        %v903 = vpop.permute.xlu0 %902
        %904 = vrot.lane.b32.xlu0 %v899, 15
        %v905 = vpop.permute.xlu0 %904
        %vm908 = vcmask 121856
        %v909 = vsel %vm908, 0.0, %v903
        %v910 = vsel %vm908, 0.0, %v905
        %913 = vrot.lane.b32.xlu0 %v909, 127
        %v914 = vpop.permute.xlu0 %913
        %915 = vrot.lane.b32.xlu0 %v910, 127
        %v916 = vpop.permute.xlu0 %915
        %919 = vrot.lane.b32.xlu0 %v909, 30
        %v920 = vpop.permute.xlu0 %919
        %921 = vrot.lane.b32.xlu0 %v910, 30
        %v922 = vpop.permute.xlu0 %921
        %vm925 = vcmask 244736
        %v926 = vsel %vm925, %v914, %v920
        %v927 = vsel %vm925, %v916, %v922
        %v928 = vsel %vm715, %v926, %v909
        %v929 = vsel %vm716, %v927, %v910
        %932 = vrot.lane.b32.xlu0 %v928, 126
        %v933 = vpop.permute.xlu0 %932
        %934 = vrot.lane.b32.xlu0 %v929, 126
        %v935 = vpop.permute.xlu0 %934
        %938 = vrot.lane.b32.xlu0 %v928, 29
        %v939 = vpop.permute.xlu0 %938
        %940 = vrot.lane.b32.xlu0 %v929, 29
        %v941 = vpop.permute.xlu0 %940
        %vm944 = vcmask 236544
        %v945 = vsel %vm944, %v933, %v939
        %v946 = vsel %vm944, %v935, %v941
        %v947 = vsel %vm738, %v945, %v928
        %v948 = vsel %vm739, %v946, %v929
        %951 = vrot.lane.b32.xlu0 %v947, 124
        %v952 = vpop.permute.xlu0 %951
        %953 = vrot.lane.b32.xlu0 %v948, 124
        %v954 = vpop.permute.xlu0 %953
        %957 = vrot.lane.b32.xlu0 %v947, 27
        %v958 = vpop.permute.xlu0 %957
        %959 = vrot.lane.b32.xlu0 %v948, 27
        %v960 = vpop.permute.xlu0 %959
        %vm963 = vcmask 220160
        %v964 = vsel %vm963, %v952, %v958
        %v965 = vsel %vm963, %v954, %v960
        %v966 = vsel %vm761, %v964, %v947
        %v967 = vsel %vm762, %v965, %v948
        %970 = vrot.lane.b32.xlu0 %v966, 120
        %v971 = vpop.permute.xlu0 %970
        %972 = vrot.lane.b32.xlu0 %v967, 120
        %v973 = vpop.permute.xlu0 %972
        %976 = vrot.lane.b32.xlu0 %v966, 23
        %v977 = vpop.permute.xlu0 %976
        %978 = vrot.lane.b32.xlu0 %v967, 23
        %v979 = vpop.permute.xlu0 %978
        %vm982 = vcmask 187392
        %v983 = vsel %vm982, %v971, %v977
        %v984 = vsel %vm982, %v973, %v979
        %v985 = vsel %vm783, %v983, %v966
        %v986 = vsel %vm784, %v984, %v967
        %987 = vxpose.xlu0.b32.start [1/16] %v562, 128
        %988 = vxpose.xlu0.b32.cont [2/16] %v563, 128
        %989 = vxpose.xlu0.b32.cont [3/16] %v564, 128
        %990 = vxpose.xlu0.b32.cont [4/16] %v565, 128
        %991 = vxpose.xlu0.b32.cont [5/16] 0.0, 128
        %992 = vxpose.xlu0.b32.cont [6/16] 0.0, 128
        %993 = vxpose.xlu0.b32.cont [7/16] 0.0, 128
        %994 = vxpose.xlu0.b32.cont [8/16] 0.0, 128
        %995 = vxpose.xlu0.b32.cont [9/16] 0.0, 128
        %996 = vxpose.xlu0.b32.cont [10/16] 0.0, 128
        %997 = vxpose.xlu0.b32.cont [11/16] 0.0, 128
        %998 = vxpose.xlu0.b32.cont [12/16] 0.0, 128
        %999 = vxpose.xlu0.b32.cont [13/16] 0.0, 128
        %1000 = vxpose.xlu0.b32.cont [14/16] 0.0, 128
        %1001 = vxpose.xlu0.b32.cont [15/16] 0.0, 128
        %1002 = vxpose.xlu0.b32.end [16/16] 0.0, 128
        %v1003 = vpop.trf.xlu0
        %v1004 = vpop.trf.xlu0
        %v1005 = vpop.trf.xlu0
        %v1006 = vpop.trf.xlu0
        %v1007 = vpop.trf.xlu0
        %v1008 = vpop.trf.xlu0
        %v1009 = vpop.trf.xlu0
        %v1010 = vpop.trf.xlu0
        %v1011 = vpop.trf.xlu0
        %v1012 = vpop.trf.xlu0
        %v1013 = vpop.trf.xlu0
        %v1014 = vpop.trf.xlu0
        %v1015 = vpop.trf.xlu0
        %v1016 = vpop.trf.xlu0
        %v1017 = vpop.trf.xlu0
        %v1018 = vpop.trf.xlu0
        %vm1019 = vcmask 252928
        %v1021 = vsel %vm1019, %v1003, 0
        %v1024 = vsel %vm1019, %v985, 0
        %v1027 = vsel %vm1019, %v986, 0
        %1029 = vmatprep.subr.mxu0 0.0
        %1030 = vmatpush1.xpose.msra.mxu0 0.0
        %1031 = vmatprep.subr.mxu0 0.0
        %1032 = vmatpush1.xpose.msra.mxu0 0.0
        %1033 = vmatprep.subr.mxu0 0.0
        %1034 = vmatpush1.xpose.msra.mxu0 0.0
        %1035 = vmatprep.subr.mxu0 0.0
        %1036 = vmatpush1.xpose.msra.mxu0 0.0
        %1037 = vmatprep.subr.mxu0 0.0
        %1038 = vmatpush1.xpose.msra.mxu0 0.0
        %1039 = vmatprep.subr.mxu0 0.0
        %1040 = vmatpush1.xpose.msra.mxu0 0.0
        %1041 = vmatprep.subr.mxu0 0.0
        %1042 = vmatpush1.xpose.msra.mxu0 0.0
        %1043 = vmatprep.subr.mxu0 0.0
        %1044 = vmatpush1.xpose.msra.mxu0 0.0
        %1045 = vmatprep.subr.mxu0 0.0
        %1046 = vmatpush1.xpose.msra.mxu0 0.0
        %1047 = vmatprep.subr.mxu0 0.0
        %1048 = vmatpush1.xpose.msra.mxu0 0.0
        %1049 = vmatprep.subr.mxu0 0.0
        %1050 = vmatpush1.xpose.msra.mxu0 0.0
        %1051 = vmatprep.subr.mxu0 0.0
        %1052 = vmatpush1.xpose.msra.mxu0 0.0
        %1053 = vmatprep.subr.mxu0 0.0
        %1054 = vmatpush1.xpose.msra.mxu0 0.0
        %1055 = vmatprep.subr.mxu0 0.0
        %1056 = vmatpush1.xpose.msra.mxu0 0.0
        %1057 = vmatprep.subr.mxu0 0.0
        %1058 = vmatpush1.xpose.msra.mxu0 %v1027
        %1059 = vmatprep.subr.mxu0 0.0
        %1060 = vmatpush1.xpose.msra.mxu0 %v1024
        %1061 = vmatprep.subr.mxu0 0.0
        %1062 = vmatpush2.xpose.msra.mxu0 0.0
        %1063 = vmatprep.subr.mxu0 0.0
        %1064 = vmatpush2.xpose.msra.mxu0 0.0
        %1065 = vmatprep.subr.mxu0 0.0
        %1066 = vmatpush2.xpose.msra.mxu0 0.0
        %1067 = vmatprep.subr.mxu0 0.0
        %1068 = vmatpush2.xpose.msra.mxu0 0.0
        %1069 = vmatprep.subr.mxu0 0.0
        %1070 = vmatpush2.xpose.msra.mxu0 0.0
        %1071 = vmatprep.subr.mxu0 0.0
        %1072 = vmatpush2.xpose.msra.mxu0 0.0
        %1073 = vmatprep.subr.mxu0 0.0
        %1074 = vmatpush2.xpose.msra.mxu0 0.0
        %1075 = vmatprep.subr.mxu0 0.0
        %1076 = vmatpush2.xpose.msra.mxu0 0.0
        %1077 = vmatprep.subr.mxu0 0.0
        %1078 = vmatpush2.xpose.msra.mxu0 0.0
        %1079 = vmatprep.subr.mxu0 0.0
        %1080 = vmatpush2.xpose.msra.mxu0 0.0
        %1081 = vmatprep.subr.mxu0 0.0
        %1082 = vmatpush2.xpose.msra.mxu0 0.0
        %1083 = vmatprep.subr.mxu0 0.0
        %1084 = vmatpush2.xpose.msra.mxu0 0.0
        %1085 = vmatprep.subr.mxu0 0.0
        %1086 = vmatpush2.xpose.msra.mxu0 0.0
        %1087 = vmatprep.subr.mxu0 0.0
        %1088 = vmatpush2.xpose.msra.mxu0 0.0
        %1089 = vmatprep.subr.mxu0 0.0
        %1090 = vmatpush2.xpose.msra.mxu0 0.0
        %1091 = vmatprep.subr.mxu0 0.0
        %1092 = vmatpush2.xpose.msra.mxu0 0.0
        %1093 = vmatprep.mubr.f32.mxu0 0.0
        %1094 = vmatmul.mubr.f32.gmra.mxu0 %v1021
        %v1095 = vpop.f32.mrf.mxu0
        %v1096 = vadd.f32 0.0, %v1095
        %v1097 = vpop.f32.mrf.mxu0
        %1098 = vdwg.mxu0
        %v1100 = vsel %vm536, %v581, 0
        %v1102 = vsel %vm536, %v898, 0
        %v1104 = vsel %vm536, %v899, 0
        %1106 = vmatprep.subr.mxu0 0.0
        %1107 = vmatpush1.xpose.msra.mxu0 0.0
        %1108 = vmatprep.subr.mxu0 0.0
        %1109 = vmatpush1.xpose.msra.mxu0 0.0
        %1110 = vmatprep.subr.mxu0 0.0
        %1111 = vmatpush1.xpose.msra.mxu0 0.0
        %1112 = vmatprep.subr.mxu0 0.0
        %1113 = vmatpush1.xpose.msra.mxu0 0.0
        %1114 = vmatprep.subr.mxu0 0.0
        %1115 = vmatpush1.xpose.msra.mxu0 0.0
        %1116 = vmatprep.subr.mxu0 0.0
        %1117 = vmatpush1.xpose.msra.mxu0 0.0
        %1118 = vmatprep.subr.mxu0 0.0
        %1119 = vmatpush1.xpose.msra.mxu0 0.0
        %1120 = vmatprep.subr.mxu0 0.0
        %1121 = vmatpush1.xpose.msra.mxu0 0.0
        %1122 = vmatprep.subr.mxu0 0.0
        %1123 = vmatpush1.xpose.msra.mxu0 0.0
        %1124 = vmatprep.subr.mxu0 0.0
        %1125 = vmatpush1.xpose.msra.mxu0 0.0
        %1126 = vmatprep.subr.mxu0 0.0
        %1127 = vmatpush1.xpose.msra.mxu0 0.0
        %1128 = vmatprep.subr.mxu0 0.0
        %1129 = vmatpush1.xpose.msra.mxu0 0.0
        %1130 = vmatprep.subr.mxu0 0.0
        %1131 = vmatpush1.xpose.msra.mxu0 0.0
        %1132 = vmatprep.subr.mxu0 0.0
        %1133 = vmatpush1.xpose.msra.mxu0 0.0
        %1134 = vmatprep.subr.mxu0 0.0
        %1135 = vmatpush1.xpose.msra.mxu0 %v1104
        %1136 = vmatprep.subr.mxu0 0.0
        %1137 = vmatpush1.xpose.msra.mxu0 %v1102
        %1138 = vmatprep.subr.mxu0 0.0
        %1139 = vmatpush2.xpose.msra.mxu0 0.0
        %1140 = vmatprep.subr.mxu0 0.0
        %1141 = vmatpush2.xpose.msra.mxu0 0.0
        %1142 = vmatprep.subr.mxu0 0.0
        %1143 = vmatpush2.xpose.msra.mxu0 0.0
        %1144 = vmatprep.subr.mxu0 0.0
        %1145 = vmatpush2.xpose.msra.mxu0 0.0
        %1146 = vmatprep.subr.mxu0 0.0
        %1147 = vmatpush2.xpose.msra.mxu0 0.0
        %1148 = vmatprep.subr.mxu0 0.0
        %1149 = vmatpush2.xpose.msra.mxu0 0.0
        %1150 = vmatprep.subr.mxu0 0.0
        %1151 = vmatpush2.xpose.msra.mxu0 0.0
        %1152 = vmatprep.subr.mxu0 0.0
        %1153 = vmatpush2.xpose.msra.mxu0 0.0
        %1154 = vmatprep.subr.mxu0 0.0
        %1155 = vmatpush2.xpose.msra.mxu0 0.0
        %1156 = vmatprep.subr.mxu0 0.0
        %1157 = vmatpush2.xpose.msra.mxu0 0.0
        %1158 = vmatprep.subr.mxu0 0.0
        %1159 = vmatpush2.xpose.msra.mxu0 0.0
        %1160 = vmatprep.subr.mxu0 0.0
        %1161 = vmatpush2.xpose.msra.mxu0 0.0
        %1162 = vmatprep.subr.mxu0 0.0
        %1163 = vmatpush2.xpose.msra.mxu0 0.0
        %1164 = vmatprep.subr.mxu0 0.0
        %1165 = vmatpush2.xpose.msra.mxu0 0.0
        %1166 = vmatprep.subr.mxu0 0.0
        %1167 = vmatpush2.xpose.msra.mxu0 0.0
        %1168 = vmatprep.subr.mxu0 0.0
        %1169 = vmatpush2.xpose.msra.mxu0 0.0
        %1170 = vmatprep.mubr.f32.mxu0 0.0
        %1171 = vmatmul.mubr.f32.gmra.mxu0 %v1100
        %v1172 = vpop.f32.mrf.mxu0
        %v1173 = vadd.f32 %v1096, %v1172
        %v1174 = vpop.f32.mrf.mxu0
        %1175 = vdwg.mxu0
        %s1176 = scalar_lea.vmem [#allocation3], %s572
        %1177 = vst.msk [vmem:[%s1176] sm:$0xff] %vm536, %v1173
      $region53: #{tpu_custom_call.1} parent=47 // loop_footer
        %s571 = sadd.s32 1, %s567
      $region54: #{tpu_custom_call.1} parent=47 // loop_footer_branch
        %566 = sbr.rel target = $region50
      $region55: #{tpu_custom_call.1} parent=47 // loop_exit
        _
      %v1178 = vld [vmem:[#allocation3] sm:$0xff]
      %v1179 = vld [vmem:[#allocation3 + $0x8] sm:$0xff]
      %v1180 = vld [vmem:[#allocation3 + $0x10] sm:$0xff]
      %v1181 = vld [vmem:[#allocation3 + $0x18] sm:$0xff]
      %v1182 = vld [vmem:[%s4] sm:$0xff]
      %v1183 = vld [vmem:[%s4 + $0x8] sm:$0xff]
      %v1184 = vld [vmem:[%s4 + $0x10] sm:$0xff]
      %v1185 = vld [vmem:[%s4 + $0x18] sm:$0xff]
      %v1186 = vld [vmem:[%s5] sm:$0xff]
      %v1187 = vld [vmem:[%s5 + $0x8] sm:$0xff]
      %v1188 = vld [vmem:[%s5 + $0x10] sm:$0xff]
      %v1189 = vld [vmem:[%s5 + $0x18] sm:$0xff]
      %1191 = vset.pattern.permute.xlu0 0
      %1192 = vperm.xlu0 %1191, %v1186
      %v1193 = vpop.permute.xlu0 %1192
      %1196 = vset.pattern.permute.xlu0 0
      %1197 = vperm.xlu0 %1196, %v1187
      %v1198 = vpop.permute.xlu0 %1197
      %1201 = vset.pattern.permute.xlu0 0
      %1202 = vperm.xlu0 %1201, %v1188
      %v1203 = vpop.permute.xlu0 %1202
      %1206 = vset.pattern.permute.xlu0 0
      %1207 = vperm.xlu0 %1206, %v1189
      %v1208 = vpop.permute.xlu0 %1207
      %v1211 = vsel %vm374, %v1182, 0
      %v1214 = vsel %vm374, %v1183, 0
      %v1217 = vsel %vm374, %v1184, 0
      %v1220 = vsel %vm374, %v1185, 0
      %1222 = vmatprep.subr.mxu0 0.0
      %1223 = vmatpush1.msra.mxu0 0.0
      %1224 = vmatprep.subr.mxu0 0.0
      %1225 = vmatpush1.msra.mxu0 0.0
      %1226 = vmatprep.subr.mxu0 0.0
      %1227 = vmatpush1.msra.mxu0 0.0
      %1228 = vmatprep.subr.mxu0 0.0
      %1229 = vmatpush1.msra.mxu0 0.0
      %1230 = vmatprep.subr.mxu0 0.0
      %1231 = vmatpush1.msra.mxu0 0.0
      %1232 = vmatprep.subr.mxu0 0.0
      %1233 = vmatpush1.msra.mxu0 0.0
      %1234 = vmatprep.subr.mxu0 0.0
      %1235 = vmatpush1.msra.mxu0 0.0
      %1236 = vmatprep.subr.mxu0 0.0
      %1237 = vmatpush1.msra.mxu0 0.0
      %1238 = vmatprep.subr.mxu0 0.0
      %1239 = vmatpush1.msra.mxu0 0.0
      %1240 = vmatprep.subr.mxu0 0.0
      %1241 = vmatpush1.msra.mxu0 0.0
      %1242 = vmatprep.subr.mxu0 0.0
      %1243 = vmatpush1.msra.mxu0 0.0
      %1244 = vmatprep.subr.mxu0 0.0
      %1245 = vmatpush1.msra.mxu0 0.0
      %1246 = vmatprep.subr.mxu0 0.0
      %1247 = vmatpush1.msra.mxu0 %v1181
      %1248 = vmatprep.subr.mxu0 0.0
      %1249 = vmatpush1.msra.mxu0 %v1180
      %1250 = vmatprep.subr.mxu0 0.0
      %1251 = vmatpush1.msra.mxu0 %v1179
      %1252 = vmatprep.subr.mxu0 0.0
      %1253 = vmatpush1.msra.mxu0 %v1178
      %1254 = vmatprep.subr.mxu0 0.0
      %1255 = vmatpush2.msra.mxu0 0.0
      %1256 = vmatprep.subr.mxu0 0.0
      %1257 = vmatpush2.msra.mxu0 0.0
      %1258 = vmatprep.subr.mxu0 0.0
      %1259 = vmatpush2.msra.mxu0 0.0
      %1260 = vmatprep.subr.mxu0 0.0
      %1261 = vmatpush2.msra.mxu0 0.0
      %1262 = vmatprep.subr.mxu0 0.0
      %1263 = vmatpush2.msra.mxu0 0.0
      %1264 = vmatprep.subr.mxu0 0.0
      %1265 = vmatpush2.msra.mxu0 0.0
      %1266 = vmatprep.subr.mxu0 0.0
      %1267 = vmatpush2.msra.mxu0 0.0
      %1268 = vmatprep.subr.mxu0 0.0
      %1269 = vmatpush2.msra.mxu0 0.0
      %1270 = vmatprep.subr.mxu0 0.0
      %1271 = vmatpush2.msra.mxu0 0.0
      %1272 = vmatprep.subr.mxu0 0.0
      %1273 = vmatpush2.msra.mxu0 0.0
      %1274 = vmatprep.subr.mxu0 0.0
      %1275 = vmatpush2.msra.mxu0 0.0
      %1276 = vmatprep.subr.mxu0 0.0
      %1277 = vmatpush2.msra.mxu0 0.0
      %1278 = vmatprep.subr.mxu0 0.0
      %1279 = vmatpush2.msra.mxu0 0.0
      %1280 = vmatprep.subr.mxu0 0.0
      %1281 = vmatpush2.msra.mxu0 0.0
      %1282 = vmatprep.subr.mxu0 0.0
      %1283 = vmatpush2.msra.mxu0 0.0
      %1284 = vmatprep.subr.mxu0 0.0
      %1285 = vmatpush2.msra.mxu0 0.0
      %1286 = vmatprep.mubr.f32.mxu0 0.0
      %1287 = vmatmul.mubr.f32.gmra.mxu0 %v1211
      %v1288 = vpop.f32.mrf.mxu0
      %v1289 = vadd.f32 %v1193, %v1288
      %v1290 = vpop.f32.mrf.mxu0
      %1291 = vmatprep.mubr.f32.mxu0 0.0
      %1292 = vmatmul.mubr.f32.gmra.mxu0 %v1214
      %v1293 = vpop.f32.mrf.mxu0
      %v1294 = vadd.f32 %v1198, %v1293
      %v1295 = vpop.f32.mrf.mxu0
      %1296 = vmatprep.mubr.f32.mxu0 0.0
      %1297 = vmatmul.mubr.f32.gmra.mxu0 %v1217
      %v1298 = vpop.f32.mrf.mxu0
      %v1299 = vadd.f32 %v1203, %v1298
      %v1300 = vpop.f32.mrf.mxu0
      %1301 = vmatprep.mubr.f32.mxu0 0.0
      %1302 = vmatmul.mubr.f32.gmra.mxu0 %v1220
      %v1303 = vpop.f32.mrf.mxu0
      %v1304 = vadd.f32 %v1208, %v1303
      %v1305 = vpop.f32.mrf.mxu0
      %1306 = vdwg.mxu0
      %1307 = vst.msk [vmem:[%s285] sm:$0xff] %vm536, %v1289
      %1308 = vst.msk [vmem:[%s285 + $0x8] sm:$0xff] %vm536, %v1294
      %1309 = vst.msk [vmem:[%s285 + $0x10] sm:$0xff] %vm536, %v1299
      %1310 = vst.msk [vmem:[%s285 + $0x18] sm:$0xff] %vm536, %v1304
      %p1311 = scmp.lt.s32.totalorder %s25, 1
      %s1312 = scalar_select %p1311, %s25, 1
      %s1313 = smul.addr %s1312, 4
      %s1314 = smul.addr %s1313, 8
      %s1315 = scalar_lea.vmem %s8, %s1314
      // Predicated region
      $region56: #{tpu_custom_call.1} parent=47 // pred_check
        %p1316 = pneg %p195
      $region57: #{tpu_custom_call.1} parent=47 // pred_check_branch
        %1318 = sbr.rel (%p1316) target = $region59
      $region58: #{tpu_custom_call.1} parent=47 // pred_region
        _
      $region59: #{tpu_custom_call.1} parent=47 // pred_fallthru
        _
    $region48: #{tpu_custom_call.1} parent=5 // pred_fallthru
      _
    %p1319 = scmp.le.s32.totalorder 2, %s20
    // Predicated region
    $region60: #{tpu_custom_call.1} parent=5 // pred_check
      %p1320 = pneg %p1319
    $region61: #{tpu_custom_call.1} parent=5 // pred_check_branch
      %1322 = sbr.rel (%p1320) target = $region63
    $region62: #{tpu_custom_call.1} parent=5 // pred_region
      %s1323 = ssub.s32 %s20, 2
      // Predicated region
      $region64: #{tpu_custom_call.1} parent=62 // pred_check
        %p1324 = pneg %p201
      $region65: #{tpu_custom_call.1} parent=62 // pred_check_branch
        %1326 = sbr.rel (%p1324) target = $region67
      $region66: #{tpu_custom_call.1} parent=62 // pred_region
        %p1327 = scmp.lt.s32.totalorder %s26, 1
        %s1328 = scalar_select %p1327, %s26, 1
        %s1329 = smul.addr %s1328, 4
        %s1330 = smul.addr %s1329, 8
        %s1331 = scalar_lea.vmem %s8, %s1330
      $region67: #{tpu_custom_call.1} parent=62 // pred_fallthru
        _
    $region63: #{tpu_custom_call.1} parent=5 // pred_fallthru
      _
  $region6: #{tpu_custom_call.1} parent=0 // loop_footer
    %s24 = sadd.s32 1, %s20
  $region7: #{tpu_custom_call.1} parent=0 // loop_footer_branch
    %19 = sbr.rel target = $region3
  $region8: #{tpu_custom_call.1} parent=0 // loop_exit
    _

</llo_original>
